<compile_context>
chip_gen: v5e
topology: v5e:2x2
jax: 0.10.0
libtpu: 0.0.40
codegen_flags: <defaults>
</compile_context>

<pallas_src>
import functools
import math

import jax
import jax.numpy as jnp
from jax.experimental import pallas as pl
from jax.experimental.pallas import tpu as pltpu


def transformer_block_kernel(
    # inputs
    xq_ref, xkv_ref,
    wq_ref, bq_ref, wk_ref, bk_ref, wv_ref, bv_ref, wo_ref, bo_ref,
    ln1_g_ref, ln1_b_ref,
    w1_ref, b1_ref, w2_ref, b2_ref,
    ln2_g_ref, ln2_b_ref,
    # outputs
    o_ref,
    # scratch (persists across the KV grid axis)
    q_scr, m_scr, l_scr, acc_scr,
    *, num_heads, ff_chunk,
):
    f32 = jnp.float32
    bf16 = jnp.bfloat16

    ki = pl.program_id(2)
    num_kv = pl.num_programs(2)

    x_q = xq_ref[0]                               # (Tq, D) f32 query-side tile (also the residual)
    Tq, D = x_q.shape
    d_k = D // num_heads
    sm_scale = 1.0 / math.sqrt(d_k)

    # ---- per-(b, q-tile) init: project Q once, reset online-softmax state ----
    @pl.when(ki == 0)
    def _init():
        q = jnp.dot(x_q.astype(bf16), wq_ref[...], preferred_element_type=f32) + bq_ref[...]
        q_scr[...] = (q * sm_scale).astype(bf16)                # fold 1/sqrt(d_k) into Q
        m_scr[...] = jnp.full(m_scr.shape, -jnp.inf, dtype=f32)
        l_scr[...] = jnp.zeros(l_scr.shape, dtype=f32)
        acc_scr[...] = jnp.zeros(acc_scr.shape, dtype=f32)

    # ---- K/V projections for this KV tile (bf16 MXU inputs, f32 accumulation) ----
    x_kv = xkv_ref[0].astype(bf16)                              # (Tk, D)
    k = (jnp.dot(x_kv, wk_ref[...], preferred_element_type=f32) + bk_ref[...]).astype(bf16)
    v = (jnp.dot(x_kv, wv_ref[...], preferred_element_type=f32) + bv_ref[...]).astype(bf16)
    q = q_scr[...]                                              # (Tq, D) bf16, pre-scaled

    # ---- online softmax, per head (contiguous column slices; no head reshape/transpose) ----
    for h in range(num_heads):
        lo, hi = h * d_k, (h + 1) * d_k
        q_h = q[:, lo:hi]                                       # (Tq, d_k)
        k_h = k[:, lo:hi]                                       # (Tk, d_k)
        v_h = v[:, lo:hi]                                       # (Tk, d_k)
        # (Tq, d_k) x (Tk, d_k) -> (Tq, Tk); lane axis = KV tile, d_k is the contraction.
        s = jax.lax.dot_general(q_h, k_h, (((1,), (1,)), ((), ())),
                                preferred_element_type=f32)
        m_prev = m_scr[h]                                       # (Tq, 1)
        m_new = jnp.maximum(m_prev, jnp.max(s, axis=-1, keepdims=True))
        alpha = jnp.exp(m_prev - m_new)
        p = jnp.exp(s - m_new)
        l_scr[h] = alpha * l_scr[h] + jnp.sum(p, axis=-1, keepdims=True)
        acc_scr[h] = alpha * acc_scr[h] + jnp.dot(p.astype(bf16), v_h,
                                                  preferred_element_type=f32)
        m_scr[h] = m_new

    # ---- finalize on the last KV tile: out-proj, LN1, chunked FF, LN2 ----
    @pl.when(ki == num_kv - 1)
    def _finalize():
        def layernorm(h, g_ref, b_ref, eps=1e-5):               # eps matches PyTorch default
            mu = jnp.mean(h, axis=-1, keepdims=True)
            var = jnp.mean(jnp.square(h - mu), axis=-1, keepdims=True)
            return (h - mu) * jax.lax.rsqrt(var + eps) * g_ref[...] + b_ref[...]

        # Output projection accumulated per head: sum_h ctx_h @ Wo[h*d_k:(h+1)*d_k, :]
        attn_out = jnp.zeros((Tq, D), f32)
        for h in range(num_heads):
            inv_l = pl.reciprocal(l_scr[h], approx=True)        # (Tq, 1)
            ctx_h = (acc_scr[h] * inv_l).astype(bf16)           # (Tq, d_k)
            attn_out = attn_out + jnp.dot(ctx_h, wo_ref[h * d_k:(h + 1) * d_k, :],
                                          preferred_element_type=f32)
        attn_out = attn_out + bo_ref[...]

        h1 = layernorm(x_q + attn_out, ln1_g_ref, ln1_b_ref)

        # Feed-forward streamed over d_ff chunks: the (Tq, d_ff) activation never materializes.
        h1_b = h1.astype(bf16)
        d_ff = w1_ref.shape[1]
        ff_out = jnp.zeros((Tq, D), f32)
        for c in range(d_ff // ff_chunk):
            lo, hi = c * ff_chunk, (c + 1) * ff_chunk
            a = jnp.dot(h1_b, w1_ref[:, lo:hi], preferred_element_type=f32) + b1_ref[:, lo:hi]
            a = jnp.maximum(a, 0.0).astype(bf16)
            ff_out = ff_out + jnp.dot(a, w2_ref[lo:hi, :], preferred_element_type=f32)
        ff_out = ff_out + b2_ref[...]

        o_ref[0] = layernorm(h1 + ff_out, ln2_g_ref, ln2_b_ref).astype(o_ref.dtype)


PARAM_ORDER = ('wq', 'bq', 'wk', 'bk', 'wv', 'bv', 'wo', 'bo',
               'ln1_g', 'ln1_b', 'w1', 'b1', 'w2', 'b2', 'ln2_g', 'ln2_b')
MATRIX_PARAMS = ('wq', 'wk', 'wv', 'wo', 'w1', 'w2')


def transformer_block(x, params, num_heads, *, tile_q=None, tile_kv=None, ff_chunk=None):
    B, S, D = x.shape
    d_ff = params['w1'].shape[1]
    assert D % num_heads == 0
    d_k = D // num_heads

    tile_q = min(S, 128) if tile_q is None else tile_q
    tile_kv = min(S, 128) if tile_kv is None else tile_kv
    ff_chunk = min(d_ff, 512) if ff_chunk is None else ff_chunk
    assert S % tile_q == 0 and S % tile_kv == 0 and d_ff % ff_chunk == 0
    # TODO(synk): pad D / d_k to multiples of 128 lanes for production shapes (demo D=32 compiles
    # but produces masked partial stores); also single-buffer the constant-index weight specs
    # (pipeline_mode=pl.Buffered(1)) once verified on the target jax build.

    # bf16 weights feed the MXU at full rate and halve resident-weight VMEM;
    # biases / LayerNorm params stay f32 (softmax & LayerNorm math is f32 throughout).
    param_list = [
        params[name].astype(jnp.bfloat16) if name in MATRIX_PARAMS
        else params[name].astype(jnp.float32)
        for name in PARAM_ORDER
    ]

    grid = (B, S // tile_q, S // tile_kv)

    in_specs = [
        pl.BlockSpec((1, tile_q, D), lambda b, qi, ki: (b, qi, 0)),    # x, query-side tile
        pl.BlockSpec((1, tile_kv, D), lambda b, qi, ki: (b, ki, 0)),   # x, KV-side tile
    ]
    for p in param_list:
        in_specs.append(pl.BlockSpec(p.shape, lambda b, qi, ki, _nd=p.ndim: (0,) * _nd))
    out_specs = pl.BlockSpec((1, tile_q, D), lambda b, qi, ki: (b, qi, 0))

    scratch_shapes = [
        pltpu.VMEM((tile_q, D), jnp.bfloat16),               # pre-scaled Q tile
        pltpu.VMEM((num_heads, tile_q, 1), jnp.float32),     # running max (per head)
        pltpu.VMEM((num_heads, tile_q, 1), jnp.float32),     # running sum (per head)
        pltpu.VMEM((num_heads, tile_q, d_k), jnp.float32),   # context accumulator
    ]

    kernel = functools.partial(transformer_block_kernel,
                               num_heads=num_heads, ff_chunk=ff_chunk)

    # Explicit VMEM budget: resident weights (pipeline double-buffers them), activation tiles,
    # scratch, plus headroom — clamped so it also fits v7x's 64 MiB physical VMEM philosophy.
    weight_bytes = sum(int(p.nbytes) for p in param_list)
    act_bytes = 2 * 4 * (tile_q * D + tile_kv * D + tile_q * D)       # double-buffered in/out tiles
    scratch_bytes = 2 * tile_q * D + 4 * num_heads * tile_q * (d_k + 2)
    vmem_limit = int(min(2 * weight_bytes + act_bytes + scratch_bytes + (16 << 20), 100 << 20))

    flops = 2 * B * S * (4 * D * D + 2 * S * D + 2 * D * d_ff)
    cost = pl.CostEstimate(
        flops=int(flops),
        transcendentals=int(B * num_heads * S * S),
        bytes_accessed=int(2 * x.nbytes + weight_bytes),
    )

    return pl.pallas_call(
        kernel,
        out_shape=jax.ShapeDtypeStruct((B, S, D), x.dtype),
        grid_spec=pltpu.PrefetchScalarGridSpec(
            num_scalar_prefetch=0,
            grid=grid,
            in_specs=in_specs,
            out_specs=out_specs,
            scratch_shapes=scratch_shapes,
        ),
        compiler_params=pltpu.CompilerParams(
            # batch & q-tile axes shard across TensorCores; the KV axis is the online-softmax
            # reduction and must stay "arbitrary" (output block is revisited across it).
            dimension_semantics=("parallel", "parallel", "arbitrary"),
            vmem_limit_bytes=vmem_limit,
        ),
        cost_estimate=cost,
    )(x, x, *param_list)


def transformer_block_ref(x, params, num_heads):
    """Plain-JAX f32 reference (mirrors the PyTorch forward) used for the correctness check."""
    B, S, D = x.shape
    d_k = D // num_heads

    def lin(h, w, b):
        return h @ w + b

    q = lin(x, params['wq'], params['bq']).reshape(B, S, num_heads, d_k).transpose(0, 2, 1, 3)
    k = lin(x, params['wk'], params['bk']).reshape(B, S, num_heads, d_k).transpose(0, 2, 1, 3)
    v = lin(x, params['wv'], params['bv']).reshape(B, S, num_heads, d_k).transpose(0, 2, 1, 3)
    scores = (q @ jnp.swapaxes(k, -2, -1)) / jnp.sqrt(jnp.float32(d_k))
    attn = jax.nn.softmax(scores, axis=-1)
    ctx = (attn @ v).transpose(0, 2, 1, 3).reshape(B, S, D)
    attn_out = lin(ctx, params['wo'], params['bo'])

    def ln(h, g, b, eps=1e-5):
        mu = jnp.mean(h, axis=-1, keepdims=True)
        var = jnp.mean((h - mu) ** 2, axis=-1, keepdims=True)
        return (h - mu) * jax.lax.rsqrt(var + eps) * g + b

    h1 = ln(x + attn_out, params['ln1_g'], params['ln1_b'])
    ff = jnp.maximum(lin(h1, params['w1'], params['b1']), 0.0)
    ff = lin(ff, params['w2'], params['b2'])
    return ln(h1 + ff, params['ln2_g'], params['ln2_b'])


def make_params(key, d_model, d_ff):
    ks = jax.random.split(key, 12)
    s = 0.1
    return {
        'wq': jax.random.normal(ks[0], (d_model, d_model), jnp.float32) * s,
        'bq': jax.random.normal(ks[1], (1, d_model), jnp.float32) * s,
        'wk': jax.random.normal(ks[2], (d_model, d_model), jnp.float32) * s,
        'bk': jax.random.normal(ks[3], (1, d_model), jnp.float32) * s,
        'wv': jax.random.normal(ks[4], (d_model, d_model), jnp.float32) * s,
        'bv': jax.random.normal(ks[5], (1, d_model), jnp.float32) * s,
        'wo': jax.random.normal(ks[6], (d_model, d_model), jnp.float32) * s,
        'bo': jax.random.normal(ks[7], (1, d_model), jnp.float32) * s,
        'w1': jax.random.normal(ks[8], (d_model, d_ff), jnp.float32) * s,
        'b1': jax.random.normal(ks[9], (1, d_ff), jnp.float32) * s,
        'w2': jax.random.normal(ks[10], (d_ff, d_model), jnp.float32) * s,
        'b2': jax.random.normal(ks[11], (1, d_model), jnp.float32) * s,
        'ln1_g': jnp.ones((1, d_model), jnp.float32),
        'ln1_b': jnp.zeros((1, d_model), jnp.float32),
        'ln2_g': jnp.ones((1, d_model), jnp.float32),
        'ln2_b': jnp.zeros((1, d_model), jnp.float32),
    }


if __name__ == "__main__":
    # Small demo shapes; S=16 with 8-wide tiles exercises the multi-tile grid and the
    # online-softmax accumulation across KV tiles.
    B, S, d_model, num_heads, d_ff = 2, 16, 32, 4, 64

    key = jax.random.PRNGKey(0)
    kx, kp = jax.random.split(key)
    x = jax.random.normal(kx, (B, S, d_model), jnp.float32)
    params = make_params(kp, d_model, d_ff)

    out = transformer_block(x, params, num_heads, tile_q=8, tile_kv=8, ff_chunk=32)
    out = jax.block_until_ready(out)

    ref = transformer_block_ref(x, params, num_heads)
    assert out.shape == (B, S, d_model)
    # bf16 matmul inputs (f32 accumulation) -> tolerance looser than a pure-f32 comparison.
    assert jnp.allclose(out, ref, atol=3e-2, rtol=3e-2), "mismatch vs JAX reference"

    print("KERNEL_OK")
</pallas_src>

<mosaic_0001>
module attributes {stable_mosaic.version = 11 : i64} {
  func.func @transformer_block_kernel(%arg0: i32, %arg1: i32, %arg2: i32, %arg3: memref<1x8x32xf32, #tpu.memory_space<vmem>>, %arg4: memref<1x8x32xf32, #tpu.memory_space<vmem>>, %arg5: memref<32x32xbf16, #tpu.memory_space<vmem>>, %arg6: memref<1x32xf32, #tpu.memory_space<vmem>>, %arg7: memref<32x32xbf16, #tpu.memory_space<vmem>>, %arg8: memref<1x32xf32, #tpu.memory_space<vmem>>, %arg9: memref<32x32xbf16, #tpu.memory_space<vmem>>, %arg10: memref<1x32xf32, #tpu.memory_space<vmem>>, %arg11: memref<32x32xbf16, #tpu.memory_space<vmem>>, %arg12: memref<1x32xf32, #tpu.memory_space<vmem>>, %arg13: memref<1x32xf32, #tpu.memory_space<vmem>>, %arg14: memref<1x32xf32, #tpu.memory_space<vmem>>, %arg15: memref<32x64xbf16, #tpu.memory_space<vmem>>, %arg16: memref<1x64xf32, #tpu.memory_space<vmem>>, %arg17: memref<64x32xbf16, #tpu.memory_space<vmem>>, %arg18: memref<1x32xf32, #tpu.memory_space<vmem>>, %arg19: memref<1x32xf32, #tpu.memory_space<vmem>>, %arg20: memref<1x32xf32, #tpu.memory_space<vmem>>, %arg21: memref<1x8x32xf32, #tpu.memory_space<vmem>>, %arg22: memref<8x32xbf16, #tpu.memory_space<vmem>>, %arg23: memref<4x8x1xf32, #tpu.memory_space<vmem>>, %arg24: memref<4x8x1xf32, #tpu.memory_space<vmem>>, %arg25: memref<4x8x8xf32, #tpu.memory_space<vmem>>) attributes {dimension_semantics = [#tpu.dimension_semantics<parallel>, #tpu.dimension_semantics<parallel>, #tpu.dimension_semantics<arbitrary>], iteration_bounds = array<i64: 2, 2, 2>, scalar_prefetch = 0 : i64, scratch_operands = 4 : i64, tpu.core_type = #tpu.core_type<tc>, window_params = [{transform_indices = @transform_0, window_bounds = array<i64: 1, 8, 32>}, {transform_indices = @transform_1, window_bounds = array<i64: 1, 8, 32>}, {pipeline_mode = #tpu.pipeline_mode<synchronous>, transform_indices = @transform_2, window_bounds = array<i64: 32, 32>}, {pipeline_mode = #tpu.pipeline_mode<synchronous>, transform_indices = @transform_3, window_bounds = array<i64: 1, 32>}, {pipeline_mode = #tpu.pipeline_mode<synchronous>, transform_indices = @transform_4, window_bounds = array<i64: 32, 32>}, {pipeline_mode = #tpu.pipeline_mode<synchronous>, transform_indices = @transform_5, window_bounds = array<i64: 1, 32>}, {pipeline_mode = #tpu.pipeline_mode<synchronous>, transform_indices = @transform_6, window_bounds = array<i64: 32, 32>}, {pipeline_mode = #tpu.pipeline_mode<synchronous>, transform_indices = @transform_7, window_bounds = array<i64: 1, 32>}, {pipeline_mode = #tpu.pipeline_mode<synchronous>, transform_indices = @transform_8, window_bounds = array<i64: 32, 32>}, {pipeline_mode = #tpu.pipeline_mode<synchronous>, transform_indices = @transform_9, window_bounds = array<i64: 1, 32>}, {pipeline_mode = #tpu.pipeline_mode<synchronous>, transform_indices = @transform_10, window_bounds = array<i64: 1, 32>}, {pipeline_mode = #tpu.pipeline_mode<synchronous>, transform_indices = @transform_11, window_bounds = array<i64: 1, 32>}, {pipeline_mode = #tpu.pipeline_mode<synchronous>, transform_indices = @transform_12, window_bounds = array<i64: 32, 64>}, {pipeline_mode = #tpu.pipeline_mode<synchronous>, transform_indices = @transform_13, window_bounds = array<i64: 1, 64>}, {pipeline_mode = #tpu.pipeline_mode<synchronous>, transform_indices = @transform_14, window_bounds = array<i64: 64, 32>}, {pipeline_mode = #tpu.pipeline_mode<synchronous>, transform_indices = @transform_15, window_bounds = array<i64: 1, 32>}, {pipeline_mode = #tpu.pipeline_mode<synchronous>, transform_indices = @transform_16, window_bounds = array<i64: 1, 32>}, {pipeline_mode = #tpu.pipeline_mode<synchronous>, transform_indices = @transform_17, window_bounds = array<i64: 1, 32>}, {transform_indices = @transform_18, window_bounds = array<i64: 1, 8, 32>}]} {
    %c0 = arith.constant 0 : index
    %c0_0 = arith.constant 0 : index
    %c0_1 = arith.constant 0 : index
    %0 = vector.load %arg3[%c0, %c0_0, %c0_1] : memref<1x8x32xf32, #tpu.memory_space<vmem>>, vector<1x8x32xf32>
    %1 = vector.shape_cast %0 : vector<1x8x32xf32> to vector<8x32xf32>
    %c0_i32 = arith.constant 0 : i32
    %2 = arith.cmpi eq, %arg2, %c0_i32 : i32
    %3 = arith.extui %2 : i1 to i32
    %c0_i32_2 = arith.constant 0 : i32
    %4 = arith.cmpi ne, %3, %c0_i32_2 : i32
    scf.if %4 {
      %168 = arith.truncf %1 : vector<8x32xf32> to vector<8x32xbf16>
      %c0_103 = arith.constant 0 : index
      %c0_104 = arith.constant 0 : index
      %169 = vector.load %arg5[%c0_103, %c0_104] : memref<32x32xbf16, #tpu.memory_space<vmem>>, vector<32x32xbf16>
      %cst_105 = arith.constant dense<0.000000e+00> : vector<8x32xf32>
      %170 = tpu.matmul %168, %169, %cst_105 {dimension_numbers = #tpu.dot_dimension_numbers<[1], [0], [0], [1], [0, 0, 1, 1], [], []>} : vector<8x32xbf16>, vector<32x32xbf16>, vector<8x32xf32> -> vector<8x32xf32>
      %c0_106 = arith.constant 0 : index
      %c0_107 = arith.constant 0 : index
      %171 = vector.load %arg6[%c0_106, %c0_107] : memref<1x32xf32, #tpu.memory_space<vmem>>, vector<1x32xf32>
      %172 = vector.broadcast %171 : vector<1x32xf32> to vector<8x32xf32>
      %173 = arith.addf %170, %172 : vector<8x32xf32>
      %cst_108 = arith.constant 0.353553385 : f32
      %174 = vector.broadcast %cst_108 : f32 to vector<8x32xf32>
      %175 = arith.mulf %173, %174 : vector<8x32xf32>
      %176 = arith.truncf %175 : vector<8x32xf32> to vector<8x32xbf16>
      %c0_109 = arith.constant 0 : index
      %c0_110 = arith.constant 0 : index
      %177 = vector.load %arg22[%c0_109, %c0_110] : memref<8x32xbf16, #tpu.memory_space<vmem>>, vector<8x32xbf16>
      tpu.vector_store %arg22[%c0_109, %c0_110], %176 {strides = array<i32>} : memref<8x32xbf16, #tpu.memory_space<vmem>>, vector<8x32xbf16>,
      %cst_111 = arith.constant 0xFF800000 : f32
      %178 = vector.broadcast %cst_111 : f32 to vector<4x8x1xf32>
      %c0_112 = arith.constant 0 : index
      %c0_113 = arith.constant 0 : index
      %c0_114 = arith.constant 0 : index
      %179 = vector.load %arg23[%c0_112, %c0_113, %c0_114] : memref<4x8x1xf32, #tpu.memory_space<vmem>>, vector<4x8x1xf32>
      tpu.vector_store %arg23[%c0_112, %c0_113, %c0_114], %178 {strides = array<i32>} : memref<4x8x1xf32, #tpu.memory_space<vmem>>, vector<4x8x1xf32>,
      %cst_115 = arith.constant 0.000000e+00 : f32
      %180 = vector.broadcast %cst_115 : f32 to vector<4x8x1xf32>
      %c0_116 = arith.constant 0 : index
      %c0_117 = arith.constant 0 : index
      %c0_118 = arith.constant 0 : index
      %181 = vector.load %arg24[%c0_116, %c0_117, %c0_118] : memref<4x8x1xf32, #tpu.memory_space<vmem>>, vector<4x8x1xf32>
      tpu.vector_store %arg24[%c0_116, %c0_117, %c0_118], %180 {strides = array<i32>} : memref<4x8x1xf32, #tpu.memory_space<vmem>>, vector<4x8x1xf32>,
      %cst_119 = arith.constant 0.000000e+00 : f32
      %182 = vector.broadcast %cst_119 : f32 to vector<4x8x8xf32>
      %c0_120 = arith.constant 0 : index
      %c0_121 = arith.constant 0 : index
      %c0_122 = arith.constant 0 : index
      %183 = vector.load %arg25[%c0_120, %c0_121, %c0_122] : memref<4x8x8xf32, #tpu.memory_space<vmem>>, vector<4x8x8xf32>
      tpu.vector_store %arg25[%c0_120, %c0_121, %c0_122], %182 {strides = array<i32>} : memref<4x8x8xf32, #tpu.memory_space<vmem>>, vector<4x8x8xf32>,
    } else {
    }
    %c0_3 = arith.constant 0 : index
    %c0_4 = arith.constant 0 : index
    %c0_5 = arith.constant 0 : index
    %5 = vector.load %arg4[%c0_3, %c0_4, %c0_5] : memref<1x8x32xf32, #tpu.memory_space<vmem>>, vector<1x8x32xf32>
    %6 = vector.shape_cast %5 : vector<1x8x32xf32> to vector<8x32xf32>
    %7 = arith.truncf %6 : vector<8x32xf32> to vector<8x32xbf16>
    %c0_6 = arith.constant 0 : index
    %c0_7 = arith.constant 0 : index
    %8 = vector.load %arg7[%c0_6, %c0_7] : memref<32x32xbf16, #tpu.memory_space<vmem>>, vector<32x32xbf16>
    %cst = arith.constant dense<0.000000e+00> : vector<8x32xf32>
    %9 = tpu.matmul %7, %8, %cst {dimension_numbers = #tpu.dot_dimension_numbers<[1], [0], [0], [1], [0, 0, 1, 1], [], []>} : vector<8x32xbf16>, vector<32x32xbf16>, vector<8x32xf32> -> vector<8x32xf32>
    %c0_8 = arith.constant 0 : index
    %c0_9 = arith.constant 0 : index
    %10 = vector.load %arg8[%c0_8, %c0_9] : memref<1x32xf32, #tpu.memory_space<vmem>>, vector<1x32xf32>
    %11 = vector.broadcast %10 : vector<1x32xf32> to vector<8x32xf32>
    %12 = arith.addf %9, %11 : vector<8x32xf32>
    %13 = arith.truncf %12 : vector<8x32xf32> to vector<8x32xbf16>
    %c0_10 = arith.constant 0 : index
    %c0_11 = arith.constant 0 : index
    %14 = vector.load %arg9[%c0_10, %c0_11] : memref<32x32xbf16, #tpu.memory_space<vmem>>, vector<32x32xbf16>
    %cst_12 = arith.constant dense<0.000000e+00> : vector<8x32xf32>
    %15 = tpu.matmul %7, %14, %cst_12 {dimension_numbers = #tpu.dot_dimension_numbers<[1], [0], [0], [1], [0, 0, 1, 1], [], []>} : vector<8x32xbf16>, vector<32x32xbf16>, vector<8x32xf32> -> vector<8x32xf32>
    %c0_13 = arith.constant 0 : index
    %c0_14 = arith.constant 0 : index
    %16 = vector.load %arg10[%c0_13, %c0_14] : memref<1x32xf32, #tpu.memory_space<vmem>>, vector<1x32xf32>
    %17 = vector.broadcast %16 : vector<1x32xf32> to vector<8x32xf32>
    %18 = arith.addf %15, %17 : vector<8x32xf32>
    %19 = arith.truncf %18 : vector<8x32xf32> to vector<8x32xbf16>
    %c0_15 = arith.constant 0 : index
    %c0_16 = arith.constant 0 : index
    %20 = vector.load %arg22[%c0_15, %c0_16] : memref<8x32xbf16, #tpu.memory_space<vmem>>, vector<8x32xbf16>
    %21 = vector.extract_strided_slice %20 {offsets = [0, 0], sizes = [8, 8], strides = [1, 1]} : vector<8x32xbf16> to vector<8x8xbf16>
    %22 = vector.extract_strided_slice %13 {offsets = [0, 0], sizes = [8, 8], strides = [1, 1]} : vector<8x32xbf16> to vector<8x8xbf16>
    %23 = vector.extract_strided_slice %19 {offsets = [0, 0], sizes = [8, 8], strides = [1, 1]} : vector<8x32xbf16> to vector<8x8xbf16>
    %cst_17 = arith.constant dense<0.000000e+00> : vector<8x8xf32>
    %24 = tpu.matmul %21, %22, %cst_17 {dimension_numbers = #tpu.dot_dimension_numbers<[1], [1], [0], [0], [0, 0, 1, 0], [], []>} : vector<8x8xbf16>, vector<8x8xbf16>, vector<8x8xf32> -> vector<8x8xf32>
    %c0_18 = arith.constant 0 : index
    %c0_19 = arith.constant 0 : index
    %c0_20 = arith.constant 0 : index
    %25 = vector.load %arg23[%c0_18, %c0_19, %c0_20] : memref<4x8x1xf32, #tpu.memory_space<vmem>>, vector<1x8x1xf32>
    %26 = vector.shape_cast %25 : vector<1x8x1xf32> to vector<8x1xf32>
    %cst_21 = arith.constant dense<0xFF800000> : vector<8xf32>
    %27 = vector.multi_reduction <maximumf>, %24, %cst_21 [1] : vector<8x8xf32> to vector<8xf32>
    %28 = vector.shape_cast %27 : vector<8xf32> to vector<8x1xf32>
    %29 = arith.maximumf %26, %28 : vector<8x1xf32>
    %30 = arith.subf %26, %29 : vector<8x1xf32>
    %31 = math.exp %30 : vector<8x1xf32>
    %32 = vector.broadcast %29 : vector<8x1xf32> to vector<8x8xf32>
    %33 = arith.subf %24, %32 : vector<8x8xf32>
    %34 = math.exp %33 : vector<8x8xf32>
    %c0_22 = arith.constant 0 : index
    %c0_23 = arith.constant 0 : index
    %c0_24 = arith.constant 0 : index
    %35 = vector.load %arg24[%c0_22, %c0_23, %c0_24] : memref<4x8x1xf32, #tpu.memory_space<vmem>>, vector<1x8x1xf32>
    %36 = vector.shape_cast %35 : vector<1x8x1xf32> to vector<8x1xf32>
    %37 = arith.mulf %31, %36 : vector<8x1xf32>
    %cst_25 = arith.constant dense<0.000000e+00> : vector<8xf32>
    %38 = vector.multi_reduction <add>, %34, %cst_25 [1] : vector<8x8xf32> to vector<8xf32>
    %39 = vector.shape_cast %38 : vector<8xf32> to vector<8x1xf32>
    %40 = arith.addf %37, %39 : vector<8x1xf32>
    %c0_26 = arith.constant 0 : index
    %c0_27 = arith.constant 0 : index
    %c0_28 = arith.constant 0 : index
    %41 = vector.load %arg24[%c0_26, %c0_27, %c0_28] : memref<4x8x1xf32, #tpu.memory_space<vmem>>, vector<1x8x1xf32>
    %42 = vector.shape_cast %41 : vector<1x8x1xf32> to vector<8x1xf32>
    %43 = vector.shape_cast %40 : vector<8x1xf32> to vector<1x8x1xf32>
    tpu.vector_store %arg24[%c0_26, %c0_27, %c0_28], %43 {strides = array<i32>} : memref<4x8x1xf32, #tpu.memory_space<vmem>>, vector<1x8x1xf32>,
    %c0_29 = arith.constant 0 : index
    %c0_30 = arith.constant 0 : index
    %c0_31 = arith.constant 0 : index
    %44 = vector.load %arg25[%c0_29, %c0_30, %c0_31] : memref<4x8x8xf32, #tpu.memory_space<vmem>>, vector<1x8x8xf32>
    %45 = vector.shape_cast %44 : vector<1x8x8xf32> to vector<8x8xf32>
    %46 = vector.broadcast %31 : vector<8x1xf32> to vector<8x8xf32>
    %47 = arith.mulf %46, %45 : vector<8x8xf32>
    %48 = arith.truncf %34 : vector<8x8xf32> to vector<8x8xbf16>
    %cst_32 = arith.constant dense<0.000000e+00> : vector<8x8xf32>
    %49 = tpu.matmul %48, %23, %cst_32 {dimension_numbers = #tpu.dot_dimension_numbers<[1], [0], [0], [1], [0, 0, 1, 1], [], []>} : vector<8x8xbf16>, vector<8x8xbf16>, vector<8x8xf32> -> vector<8x8xf32>
    %50 = arith.addf %47, %49 : vector<8x8xf32>
    %c0_33 = arith.constant 0 : index
    %c0_34 = arith.constant 0 : index
    %c0_35 = arith.constant 0 : index
    %51 = vector.load %arg25[%c0_33, %c0_34, %c0_35] : memref<4x8x8xf32, #tpu.memory_space<vmem>>, vector<1x8x8xf32>
    %52 = vector.shape_cast %51 : vector<1x8x8xf32> to vector<8x8xf32>
    %53 = vector.shape_cast %50 : vector<8x8xf32> to vector<1x8x8xf32>
    tpu.vector_store %arg25[%c0_33, %c0_34, %c0_35], %53 {strides = array<i32>} : memref<4x8x8xf32, #tpu.memory_space<vmem>>, vector<1x8x8xf32>,
    %c0_36 = arith.constant 0 : index
    %c0_37 = arith.constant 0 : index
    %c0_38 = arith.constant 0 : index
    %54 = vector.load %arg23[%c0_36, %c0_37, %c0_38] : memref<4x8x1xf32, #tpu.memory_space<vmem>>, vector<1x8x1xf32>
    %55 = vector.shape_cast %54 : vector<1x8x1xf32> to vector<8x1xf32>
    %56 = vector.shape_cast %29 : vector<8x1xf32> to vector<1x8x1xf32>
    tpu.vector_store %arg23[%c0_36, %c0_37, %c0_38], %56 {strides = array<i32>} : memref<4x8x1xf32, #tpu.memory_space<vmem>>, vector<1x8x1xf32>,
    %57 = vector.extract_strided_slice %20 {offsets = [0, 8], sizes = [8, 8], strides = [1, 1]} : vector<8x32xbf16> to vector<8x8xbf16>
    %58 = vector.extract_strided_slice %13 {offsets = [0, 8], sizes = [8, 8], strides = [1, 1]} : vector<8x32xbf16> to vector<8x8xbf16>
    %59 = vector.extract_strided_slice %19 {offsets = [0, 8], sizes = [8, 8], strides = [1, 1]} : vector<8x32xbf16> to vector<8x8xbf16>
    %cst_39 = arith.constant dense<0.000000e+00> : vector<8x8xf32>
    %60 = tpu.matmul %57, %58, %cst_39 {dimension_numbers = #tpu.dot_dimension_numbers<[1], [1], [0], [0], [0, 0, 1, 0], [], []>} : vector<8x8xbf16>, vector<8x8xbf16>, vector<8x8xf32> -> vector<8x8xf32>
    %c1 = arith.constant 1 : index
    %c0_40 = arith.constant 0 : index
    %c0_41 = arith.constant 0 : index
    %61 = vector.load %arg23[%c1, %c0_40, %c0_41] : memref<4x8x1xf32, #tpu.memory_space<vmem>>, vector<1x8x1xf32>
    %62 = vector.shape_cast %61 : vector<1x8x1xf32> to vector<8x1xf32>
    %cst_42 = arith.constant dense<0xFF800000> : vector<8xf32>
    %63 = vector.multi_reduction <maximumf>, %60, %cst_42 [1] : vector<8x8xf32> to vector<8xf32>
    %64 = vector.shape_cast %63 : vector<8xf32> to vector<8x1xf32>
    %65 = arith.maximumf %62, %64 : vector<8x1xf32>
    %66 = arith.subf %62, %65 : vector<8x1xf32>
    %67 = math.exp %66 : vector<8x1xf32>
    %68 = vector.broadcast %65 : vector<8x1xf32> to vector<8x8xf32>
    %69 = arith.subf %60, %68 : vector<8x8xf32>
    %70 = math.exp %69 : vector<8x8xf32>
    %c1_43 = arith.constant 1 : index
    %c0_44 = arith.constant 0 : index
    %c0_45 = arith.constant 0 : index
    %71 = vector.load %arg24[%c1_43, %c0_44, %c0_45] : memref<4x8x1xf32, #tpu.memory_space<vmem>>, vector<1x8x1xf32>
    %72 = vector.shape_cast %71 : vector<1x8x1xf32> to vector<8x1xf32>
    %73 = arith.mulf %67, %72 : vector<8x1xf32>
    %cst_46 = arith.constant dense<0.000000e+00> : vector<8xf32>
    %74 = vector.multi_reduction <add>, %70, %cst_46 [1] : vector<8x8xf32> to vector<8xf32>
    %75 = vector.shape_cast %74 : vector<8xf32> to vector<8x1xf32>
    %76 = arith.addf %73, %75 : vector<8x1xf32>
    %c1_47 = arith.constant 1 : index
    %c0_48 = arith.constant 0 : index
    %c0_49 = arith.constant 0 : index
    %77 = vector.load %arg24[%c1_47, %c0_48, %c0_49] : memref<4x8x1xf32, #tpu.memory_space<vmem>>, vector<1x8x1xf32>
    %78 = vector.shape_cast %77 : vector<1x8x1xf32> to vector<8x1xf32>
    %79 = vector.shape_cast %76 : vector<8x1xf32> to vector<1x8x1xf32>
    tpu.vector_store %arg24[%c1_47, %c0_48, %c0_49], %79 {strides = array<i32>} : memref<4x8x1xf32, #tpu.memory_space<vmem>>, vector<1x8x1xf32>,
    %c1_50 = arith.constant 1 : index
    %c0_51 = arith.constant 0 : index
    %c0_52 = arith.constant 0 : index
    %80 = vector.load %arg25[%c1_50, %c0_51, %c0_52] : memref<4x8x8xf32, #tpu.memory_space<vmem>>, vector<1x8x8xf32>
    %81 = vector.shape_cast %80 : vector<1x8x8xf32> to vector<8x8xf32>
    %82 = vector.broadcast %67 : vector<8x1xf32> to vector<8x8xf32>
    %83 = arith.mulf %82, %81 : vector<8x8xf32>
    %84 = arith.truncf %70 : vector<8x8xf32> to vector<8x8xbf16>
    %cst_53 = arith.constant dense<0.000000e+00> : vector<8x8xf32>
    %85 = tpu.matmul %84, %59, %cst_53 {dimension_numbers = #tpu.dot_dimension_numbers<[1], [0], [0], [1], [0, 0, 1, 1], [], []>} : vector<8x8xbf16>, vector<8x8xbf16>, vector<8x8xf32> -> vector<8x8xf32>
    %86 = arith.addf %83, %85 : vector<8x8xf32>
    %c1_54 = arith.constant 1 : index
    %c0_55 = arith.constant 0 : index
    %c0_56 = arith.constant 0 : index
    %87 = vector.load %arg25[%c1_54, %c0_55, %c0_56] : memref<4x8x8xf32, #tpu.memory_space<vmem>>, vector<1x8x8xf32>
    %88 = vector.shape_cast %87 : vector<1x8x8xf32> to vector<8x8xf32>
    %89 = vector.shape_cast %86 : vector<8x8xf32> to vector<1x8x8xf32>
    tpu.vector_store %arg25[%c1_54, %c0_55, %c0_56], %89 {strides = array<i32>} : memref<4x8x8xf32, #tpu.memory_space<vmem>>, vector<1x8x8xf32>,
    %c1_57 = arith.constant 1 : index
    %c0_58 = arith.constant 0 : index
    %c0_59 = arith.constant 0 : index
    %90 = vector.load %arg23[%c1_57, %c0_58, %c0_59] : memref<4x8x1xf32, #tpu.memory_space<vmem>>, vector<1x8x1xf32>
    %91 = vector.shape_cast %90 : vector<1x8x1xf32> to vector<8x1xf32>
    %92 = vector.shape_cast %65 : vector<8x1xf32> to vector<1x8x1xf32>
    tpu.vector_store %arg23[%c1_57, %c0_58, %c0_59], %92 {strides = array<i32>} : memref<4x8x1xf32, #tpu.memory_space<vmem>>, vector<1x8x1xf32>,
    %93 = vector.extract_strided_slice %20 {offsets = [0, 16], sizes = [8, 8], strides = [1, 1]} : vector<8x32xbf16> to vector<8x8xbf16>
    %94 = vector.extract_strided_slice %13 {offsets = [0, 16], sizes = [8, 8], strides = [1, 1]} : vector<8x32xbf16> to vector<8x8xbf16>
    %95 = vector.extract_strided_slice %19 {offsets = [0, 16], sizes = [8, 8], strides = [1, 1]} : vector<8x32xbf16> to vector<8x8xbf16>
    %cst_60 = arith.constant dense<0.000000e+00> : vector<8x8xf32>
    %96 = tpu.matmul %93, %94, %cst_60 {dimension_numbers = #tpu.dot_dimension_numbers<[1], [1], [0], [0], [0, 0, 1, 0], [], []>} : vector<8x8xbf16>, vector<8x8xbf16>, vector<8x8xf32> -> vector<8x8xf32>
    %c2 = arith.constant 2 : index
    %c0_61 = arith.constant 0 : index
    %c0_62 = arith.constant 0 : index
    %97 = vector.load %arg23[%c2, %c0_61, %c0_62] : memref<4x8x1xf32, #tpu.memory_space<vmem>>, vector<1x8x1xf32>
    %98 = vector.shape_cast %97 : vector<1x8x1xf32> to vector<8x1xf32>
    %cst_63 = arith.constant dense<0xFF800000> : vector<8xf32>
    %99 = vector.multi_reduction <maximumf>, %96, %cst_63 [1] : vector<8x8xf32> to vector<8xf32>
    %100 = vector.shape_cast %99 : vector<8xf32> to vector<8x1xf32>
    %101 = arith.maximumf %98, %100 : vector<8x1xf32>
    %102 = arith.subf %98, %101 : vector<8x1xf32>
    %103 = math.exp %102 : vector<8x1xf32>
    %104 = vector.broadcast %101 : vector<8x1xf32> to vector<8x8xf32>
    %105 = arith.subf %96, %104 : vector<8x8xf32>
    %106 = math.exp %105 : vector<8x8xf32>
    %c2_64 = arith.constant 2 : index
    %c0_65 = arith.constant 0 : index
    %c0_66 = arith.constant 0 : index
    %107 = vector.load %arg24[%c2_64, %c0_65, %c0_66] : memref<4x8x1xf32, #tpu.memory_space<vmem>>, vector<1x8x1xf32>
    %108 = vector.shape_cast %107 : vector<1x8x1xf32> to vector<8x1xf32>
    %109 = arith.mulf %103, %108 : vector<8x1xf32>
    %cst_67 = arith.constant dense<0.000000e+00> : vector<8xf32>
    %110 = vector.multi_reduction <add>, %106, %cst_67 [1] : vector<8x8xf32> to vector<8xf32>
    %111 = vector.shape_cast %110 : vector<8xf32> to vector<8x1xf32>
    %112 = arith.addf %109, %111 : vector<8x1xf32>
    %c2_68 = arith.constant 2 : index
    %c0_69 = arith.constant 0 : index
    %c0_70 = arith.constant 0 : index
    %113 = vector.load %arg24[%c2_68, %c0_69, %c0_70] : memref<4x8x1xf32, #tpu.memory_space<vmem>>, vector<1x8x1xf32>
    %114 = vector.shape_cast %113 : vector<1x8x1xf32> to vector<8x1xf32>
    %115 = vector.shape_cast %112 : vector<8x1xf32> to vector<1x8x1xf32>
    tpu.vector_store %arg24[%c2_68, %c0_69, %c0_70], %115 {strides = array<i32>} : memref<4x8x1xf32, #tpu.memory_space<vmem>>, vector<1x8x1xf32>,
    %c2_71 = arith.constant 2 : index
    %c0_72 = arith.constant 0 : index
    %c0_73 = arith.constant 0 : index
    %116 = vector.load %arg25[%c2_71, %c0_72, %c0_73] : memref<4x8x8xf32, #tpu.memory_space<vmem>>, vector<1x8x8xf32>
    %117 = vector.shape_cast %116 : vector<1x8x8xf32> to vector<8x8xf32>
    %118 = vector.broadcast %103 : vector<8x1xf32> to vector<8x8xf32>
    %119 = arith.mulf %118, %117 : vector<8x8xf32>
    %120 = arith.truncf %106 : vector<8x8xf32> to vector<8x8xbf16>
    %cst_74 = arith.constant dense<0.000000e+00> : vector<8x8xf32>
    %121 = tpu.matmul %120, %95, %cst_74 {dimension_numbers = #tpu.dot_dimension_numbers<[1], [0], [0], [1], [0, 0, 1, 1], [], []>} : vector<8x8xbf16>, vector<8x8xbf16>, vector<8x8xf32> -> vector<8x8xf32>
    %122 = arith.addf %119, %121 : vector<8x8xf32>
    %c2_75 = arith.constant 2 : index
    %c0_76 = arith.constant 0 : index
    %c0_77 = arith.constant 0 : index
    %123 = vector.load %arg25[%c2_75, %c0_76, %c0_77] : memref<4x8x8xf32, #tpu.memory_space<vmem>>, vector<1x8x8xf32>
    %124 = vector.shape_cast %123 : vector<1x8x8xf32> to vector<8x8xf32>
    %125 = vector.shape_cast %122 : vector<8x8xf32> to vector<1x8x8xf32>
    tpu.vector_store %arg25[%c2_75, %c0_76, %c0_77], %125 {strides = array<i32>} : memref<4x8x8xf32, #tpu.memory_space<vmem>>, vector<1x8x8xf32>,
    %c2_78 = arith.constant 2 : index
    %c0_79 = arith.constant 0 : index
    %c0_80 = arith.constant 0 : index
    %126 = vector.load %arg23[%c2_78, %c0_79, %c0_80] : memref<4x8x1xf32, #tpu.memory_space<vmem>>, vector<1x8x1xf32>
    %127 = vector.shape_cast %126 : vector<1x8x1xf32> to vector<8x1xf32>
    %128 = vector.shape_cast %101 : vector<8x1xf32> to vector<1x8x1xf32>
    tpu.vector_store %arg23[%c2_78, %c0_79, %c0_80], %128 {strides = array<i32>} : memref<4x8x1xf32, #tpu.memory_space<vmem>>, vector<1x8x1xf32>,
    %129 = vector.extract_strided_slice %20 {offsets = [0, 24], sizes = [8, 8], strides = [1, 1]} : vector<8x32xbf16> to vector<8x8xbf16>
    %130 = vector.extract_strided_slice %13 {offsets = [0, 24], sizes = [8, 8], strides = [1, 1]} : vector<8x32xbf16> to vector<8x8xbf16>
    %131 = vector.extract_strided_slice %19 {offsets = [0, 24], sizes = [8, 8], strides = [1, 1]} : vector<8x32xbf16> to vector<8x8xbf16>
    %cst_81 = arith.constant dense<0.000000e+00> : vector<8x8xf32>
    %132 = tpu.matmul %129, %130, %cst_81 {dimension_numbers = #tpu.dot_dimension_numbers<[1], [1], [0], [0], [0, 0, 1, 0], [], []>} : vector<8x8xbf16>, vector<8x8xbf16>, vector<8x8xf32> -> vector<8x8xf32>
    %c3 = arith.constant 3 : index
    %c0_82 = arith.constant 0 : index
    %c0_83 = arith.constant 0 : index
    %133 = vector.load %arg23[%c3, %c0_82, %c0_83] : memref<4x8x1xf32, #tpu.memory_space<vmem>>, vector<1x8x1xf32>
    %134 = vector.shape_cast %133 : vector<1x8x1xf32> to vector<8x1xf32>
    %cst_84 = arith.constant dense<0xFF800000> : vector<8xf32>
    %135 = vector.multi_reduction <maximumf>, %132, %cst_84 [1] : vector<8x8xf32> to vector<8xf32>
    %136 = vector.shape_cast %135 : vector<8xf32> to vector<8x1xf32>
    %137 = arith.maximumf %134, %136 : vector<8x1xf32>
    %138 = arith.subf %134, %137 : vector<8x1xf32>
    %139 = math.exp %138 : vector<8x1xf32>
    %140 = vector.broadcast %137 : vector<8x1xf32> to vector<8x8xf32>
    %141 = arith.subf %132, %140 : vector<8x8xf32>
    %142 = math.exp %141 : vector<8x8xf32>
    %c3_85 = arith.constant 3 : index
    %c0_86 = arith.constant 0 : index
    %c0_87 = arith.constant 0 : index
    %143 = vector.load %arg24[%c3_85, %c0_86, %c0_87] : memref<4x8x1xf32, #tpu.memory_space<vmem>>, vector<1x8x1xf32>
    %144 = vector.shape_cast %143 : vector<1x8x1xf32> to vector<8x1xf32>
    %145 = arith.mulf %139, %144 : vector<8x1xf32>
    %cst_88 = arith.constant dense<0.000000e+00> : vector<8xf32>
    %146 = vector.multi_reduction <add>, %142, %cst_88 [1] : vector<8x8xf32> to vector<8xf32>
    %147 = vector.shape_cast %146 : vector<8xf32> to vector<8x1xf32>
    %148 = arith.addf %145, %147 : vector<8x1xf32>
    %c3_89 = arith.constant 3 : index
    %c0_90 = arith.constant 0 : index
    %c0_91 = arith.constant 0 : index
    %149 = vector.load %arg24[%c3_89, %c0_90, %c0_91] : memref<4x8x1xf32, #tpu.memory_space<vmem>>, vector<1x8x1xf32>
    %150 = vector.shape_cast %149 : vector<1x8x1xf32> to vector<8x1xf32>
    %151 = vector.shape_cast %148 : vector<8x1xf32> to vector<1x8x1xf32>
    tpu.vector_store %arg24[%c3_89, %c0_90, %c0_91], %151 {strides = array<i32>} : memref<4x8x1xf32, #tpu.memory_space<vmem>>, vector<1x8x1xf32>,
    %c3_92 = arith.constant 3 : index
    %c0_93 = arith.constant 0 : index
    %c0_94 = arith.constant 0 : index
    %152 = vector.load %arg25[%c3_92, %c0_93, %c0_94] : memref<4x8x8xf32, #tpu.memory_space<vmem>>, vector<1x8x8xf32>
    %153 = vector.shape_cast %152 : vector<1x8x8xf32> to vector<8x8xf32>
    %154 = vector.broadcast %139 : vector<8x1xf32> to vector<8x8xf32>
    %155 = arith.mulf %154, %153 : vector<8x8xf32>
    %156 = arith.truncf %142 : vector<8x8xf32> to vector<8x8xbf16>
    %cst_95 = arith.constant dense<0.000000e+00> : vector<8x8xf32>
    %157 = tpu.matmul %156, %131, %cst_95 {dimension_numbers = #tpu.dot_dimension_numbers<[1], [0], [0], [1], [0, 0, 1, 1], [], []>} : vector<8x8xbf16>, vector<8x8xbf16>, vector<8x8xf32> -> vector<8x8xf32>
    %158 = arith.addf %155, %157 : vector<8x8xf32>
    %c3_96 = arith.constant 3 : index
    %c0_97 = arith.constant 0 : index
    %c0_98 = arith.constant 0 : index
    %159 = vector.load %arg25[%c3_96, %c0_97, %c0_98] : memref<4x8x8xf32, #tpu.memory_space<vmem>>, vector<1x8x8xf32>
    %160 = vector.shape_cast %159 : vector<1x8x8xf32> to vector<8x8xf32>
    %161 = vector.shape_cast %158 : vector<8x8xf32> to vector<1x8x8xf32>
    tpu.vector_store %arg25[%c3_96, %c0_97, %c0_98], %161 {strides = array<i32>} : memref<4x8x8xf32, #tpu.memory_space<vmem>>, vector<1x8x8xf32>,
    %c3_99 = arith.constant 3 : index
    %c0_100 = arith.constant 0 : index
    %c0_101 = arith.constant 0 : index
    %162 = vector.load %arg23[%c3_99, %c0_100, %c0_101] : memref<4x8x1xf32, #tpu.memory_space<vmem>>, vector<1x8x1xf32>
    %163 = vector.shape_cast %162 : vector<1x8x1xf32> to vector<8x1xf32>
    %164 = vector.shape_cast %137 : vector<8x1xf32> to vector<1x8x1xf32>
    tpu.vector_store %arg23[%c3_99, %c0_100, %c0_101], %164 {strides = array<i32>} : memref<4x8x1xf32, #tpu.memory_space<vmem>>, vector<1x8x1xf32>,
    %c1_i32 = arith.constant 1 : i32
    %165 = arith.cmpi eq, %arg2, %c1_i32 : i32
    %166 = arith.extui %165 : i1 to i32
    %c0_i32_102 = arith.constant 0 : i32
    %167 = arith.cmpi ne, %166, %c0_i32_102 : i32
    scf.if %167 {
      %cst_103 = arith.constant 0.000000e+00 : f32
      %168 = vector.broadcast %cst_103 : f32 to vector<8x32xf32>
      %c0_104 = arith.constant 0 : index
      %c0_105 = arith.constant 0 : index
      %c0_106 = arith.constant 0 : index
      %169 = vector.load %arg24[%c0_104, %c0_105, %c0_106] : memref<4x8x1xf32, #tpu.memory_space<vmem>>, vector<1x8x1xf32>
      %170 = vector.shape_cast %169 : vector<1x8x1xf32> to vector<8x1xf32>
      %171 = tpu.reciprocal %170 {approx = true} : vector<8x1xf32> -> vector<8x1xf32>
      %c0_107 = arith.constant 0 : index
      %c0_108 = arith.constant 0 : index
      %c0_109 = arith.constant 0 : index
      %172 = vector.load %arg25[%c0_107, %c0_108, %c0_109] : memref<4x8x8xf32, #tpu.memory_space<vmem>>, vector<1x8x8xf32>
      %173 = vector.shape_cast %172 : vector<1x8x8xf32> to vector<8x8xf32>
      %174 = vector.broadcast %171 : vector<8x1xf32> to vector<8x8xf32>
      %175 = arith.mulf %173, %174 : vector<8x8xf32>
      %176 = arith.truncf %175 : vector<8x8xf32> to vector<8x8xbf16>
      %c0_110 = arith.constant 0 : index
      %c0_111 = arith.constant 0 : index
      %177 = vector.load %arg11[%c0_110, %c0_111] : memref<32x32xbf16, #tpu.memory_space<vmem>>, vector<8x32xbf16>
      %cst_112 = arith.constant dense<0.000000e+00> : vector<8x32xf32>
      %178 = tpu.matmul %176, %177, %cst_112 {dimension_numbers = #tpu.dot_dimension_numbers<[1], [0], [0], [1], [0, 0, 1, 1], [], []>} : vector<8x8xbf16>, vector<8x32xbf16>, vector<8x32xf32> -> vector<8x32xf32>
      %179 = arith.addf %168, %178 : vector<8x32xf32>
      %c1_113 = arith.constant 1 : index
      %c0_114 = arith.constant 0 : index
      %c0_115 = arith.constant 0 : index
      %180 = vector.load %arg24[%c1_113, %c0_114, %c0_115] : memref<4x8x1xf32, #tpu.memory_space<vmem>>, vector<1x8x1xf32>
      %181 = vector.shape_cast %180 : vector<1x8x1xf32> to vector<8x1xf32>
      %182 = tpu.reciprocal %181 {approx = true} : vector<8x1xf32> -> vector<8x1xf32>
      %c1_116 = arith.constant 1 : index
      %c0_117 = arith.constant 0 : index
      %c0_118 = arith.constant 0 : index
      %183 = vector.load %arg25[%c1_116, %c0_117, %c0_118] : memref<4x8x8xf32, #tpu.memory_space<vmem>>, vector<1x8x8xf32>
      %184 = vector.shape_cast %183 : vector<1x8x8xf32> to vector<8x8xf32>
      %185 = vector.broadcast %182 : vector<8x1xf32> to vector<8x8xf32>
      %186 = arith.mulf %184, %185 : vector<8x8xf32>
      %187 = arith.truncf %186 : vector<8x8xf32> to vector<8x8xbf16>
      %c8 = arith.constant 8 : index
      %c0_119 = arith.constant 0 : index
      %188 = vector.load %arg11[%c8, %c0_119] : memref<32x32xbf16, #tpu.memory_space<vmem>>, vector<8x32xbf16>
      %cst_120 = arith.constant dense<0.000000e+00> : vector<8x32xf32>
      %189 = tpu.matmul %187, %188, %cst_120 {dimension_numbers = #tpu.dot_dimension_numbers<[1], [0], [0], [1], [0, 0, 1, 1], [], []>} : vector<8x8xbf16>, vector<8x32xbf16>, vector<8x32xf32> -> vector<8x32xf32>
      %190 = arith.addf %179, %189 : vector<8x32xf32>
      %c2_121 = arith.constant 2 : index
      %c0_122 = arith.constant 0 : index
      %c0_123 = arith.constant 0 : index
      %191 = vector.load %arg24[%c2_121, %c0_122, %c0_123] : memref<4x8x1xf32, #tpu.memory_space<vmem>>, vector<1x8x1xf32>
      %192 = vector.shape_cast %191 : vector<1x8x1xf32> to vector<8x1xf32>
      %193 = tpu.reciprocal %192 {approx = true} : vector<8x1xf32> -> vector<8x1xf32>
      %c2_124 = arith.constant 2 : index
      %c0_125 = arith.constant 0 : index
      %c0_126 = arith.constant 0 : index
      %194 = vector.load %arg25[%c2_124, %c0_125, %c0_126] : memref<4x8x8xf32, #tpu.memory_space<vmem>>, vector<1x8x8xf32>
      %195 = vector.shape_cast %194 : vector<1x8x8xf32> to vector<8x8xf32>
      %196 = vector.broadcast %193 : vector<8x1xf32> to vector<8x8xf32>
      %197 = arith.mulf %195, %196 : vector<8x8xf32>
      %198 = arith.truncf %197 : vector<8x8xf32> to vector<8x8xbf16>
      %c16 = arith.constant 16 : index
      %c0_127 = arith.constant 0 : index
      %199 = vector.load %arg11[%c16, %c0_127] : memref<32x32xbf16, #tpu.memory_space<vmem>>, vector<8x32xbf16>
      %cst_128 = arith.constant dense<0.000000e+00> : vector<8x32xf32>
      %200 = tpu.matmul %198, %199, %cst_128 {dimension_numbers = #tpu.dot_dimension_numbers<[1], [0], [0], [1], [0, 0, 1, 1], [], []>} : vector<8x8xbf16>, vector<8x32xbf16>, vector<8x32xf32> -> vector<8x32xf32>
      %201 = arith.addf %190, %200 : vector<8x32xf32>
      %c3_129 = arith.constant 3 : index
      %c0_130 = arith.constant 0 : index
      %c0_131 = arith.constant 0 : index
      %202 = vector.load %arg24[%c3_129, %c0_130, %c0_131] : memref<4x8x1xf32, #tpu.memory_space<vmem>>, vector<1x8x1xf32>
      %203 = vector.shape_cast %202 : vector<1x8x1xf32> to vector<8x1xf32>
      %204 = tpu.reciprocal %203 {approx = true} : vector<8x1xf32> -> vector<8x1xf32>
      %c3_132 = arith.constant 3 : index
      %c0_133 = arith.constant 0 : index
      %c0_134 = arith.constant 0 : index
      %205 = vector.load %arg25[%c3_132, %c0_133, %c0_134] : memref<4x8x8xf32, #tpu.memory_space<vmem>>, vector<1x8x8xf32>
      %206 = vector.shape_cast %205 : vector<1x8x8xf32> to vector<8x8xf32>
      %207 = vector.broadcast %204 : vector<8x1xf32> to vector<8x8xf32>
      %208 = arith.mulf %206, %207 : vector<8x8xf32>
      %209 = arith.truncf %208 : vector<8x8xf32> to vector<8x8xbf16>
      %c24 = arith.constant 24 : index
      %c0_135 = arith.constant 0 : index
      %210 = vector.load %arg11[%c24, %c0_135] : memref<32x32xbf16, #tpu.memory_space<vmem>>, vector<8x32xbf16>
      %cst_136 = arith.constant dense<0.000000e+00> : vector<8x32xf32>
      %211 = tpu.matmul %209, %210, %cst_136 {dimension_numbers = #tpu.dot_dimension_numbers<[1], [0], [0], [1], [0, 0, 1, 1], [], []>} : vector<8x8xbf16>, vector<8x32xbf16>, vector<8x32xf32> -> vector<8x32xf32>
      %212 = arith.addf %201, %211 : vector<8x32xf32>
      %c0_137 = arith.constant 0 : index
      %c0_138 = arith.constant 0 : index
      %213 = vector.load %arg12[%c0_137, %c0_138] : memref<1x32xf32, #tpu.memory_space<vmem>>, vector<1x32xf32>
      %214 = vector.broadcast %213 : vector<1x32xf32> to vector<8x32xf32>
      %215 = arith.addf %212, %214 : vector<8x32xf32>
      %216 = arith.addf %1, %215 : vector<8x32xf32>
      %cst_139 = arith.constant dense<0.000000e+00> : vector<8xf32>
      %217 = vector.multi_reduction <add>, %216, %cst_139 [1] : vector<8x32xf32> to vector<8xf32>
      %218 = vector.shape_cast %217 : vector<8xf32> to vector<8x1xf32>
      %cst_140 = arith.constant 3.200000e+01 : f32
      %219 = vector.broadcast %cst_140 : f32 to vector<8x1xf32>
      %220 = arith.divf %218, %219 : vector<8x1xf32>
      %221 = vector.broadcast %220 : vector<8x1xf32> to vector<8x32xf32>
      %222 = arith.subf %216, %221 : vector<8x32xf32>
      %223 = arith.mulf %222, %222 : vector<8x32xf32>
      %cst_141 = arith.constant dense<0.000000e+00> : vector<8xf32>
      %224 = vector.multi_reduction <add>, %223, %cst_141 [1] : vector<8x32xf32> to vector<8xf32>
      %225 = vector.shape_cast %224 : vector<8xf32> to vector<8x1xf32>
      %cst_142 = arith.constant 3.200000e+01 : f32
      %226 = vector.broadcast %cst_142 : f32 to vector<8x1xf32>
      %227 = arith.divf %225, %226 : vector<8x1xf32>
      %228 = vector.broadcast %220 : vector<8x1xf32> to vector<8x32xf32>
      %229 = arith.subf %216, %228 : vector<8x32xf32>
      %cst_143 = arith.constant 9.99999974E-6 : f32
      %230 = vector.broadcast %cst_143 : f32 to vector<8x1xf32>
      %231 = arith.addf %227, %230 : vector<8x1xf32>
      %232 = math.rsqrt %231 : vector<8x1xf32>
      %233 = vector.broadcast %232 : vector<8x1xf32> to vector<8x32xf32>
      %234 = arith.mulf %229, %233 : vector<8x32xf32>
      %c0_144 = arith.constant 0 : index
      %c0_145 = arith.constant 0 : index
      %235 = vector.load %arg13[%c0_144, %c0_145] : memref<1x32xf32, #tpu.memory_space<vmem>>, vector<1x32xf32>
      %236 = vector.broadcast %235 : vector<1x32xf32> to vector<8x32xf32>
      %237 = arith.mulf %234, %236 : vector<8x32xf32>
      %c0_146 = arith.constant 0 : index
      %c0_147 = arith.constant 0 : index
      %238 = vector.load %arg14[%c0_146, %c0_147] : memref<1x32xf32, #tpu.memory_space<vmem>>, vector<1x32xf32>
      %239 = vector.broadcast %238 : vector<1x32xf32> to vector<8x32xf32>
      %240 = arith.addf %237, %239 : vector<8x32xf32>
      %241 = arith.truncf %240 : vector<8x32xf32> to vector<8x32xbf16>
      %cst_148 = arith.constant 0.000000e+00 : f32
      %242 = vector.broadcast %cst_148 : f32 to vector<8x32xf32>
      %c0_149 = arith.constant 0 : index
      %c0_150 = arith.constant 0 : index
      %243 = vector.load %arg15[%c0_149, %c0_150] : memref<32x64xbf16, #tpu.memory_space<vmem>>, vector<32x32xbf16>
      %cst_151 = arith.constant dense<0.000000e+00> : vector<8x32xf32>
      %244 = tpu.matmul %241, %243, %cst_151 {dimension_numbers = #tpu.dot_dimension_numbers<[1], [0], [0], [1], [0, 0, 1, 1], [], []>} : vector<8x32xbf16>, vector<32x32xbf16>, vector<8x32xf32> -> vector<8x32xf32>
      %c0_152 = arith.constant 0 : index
      %c0_153 = arith.constant 0 : index
      %245 = vector.load %arg16[%c0_152, %c0_153] : memref<1x64xf32, #tpu.memory_space<vmem>>, vector<1x32xf32>
      %246 = vector.broadcast %245 : vector<1x32xf32> to vector<8x32xf32>
      %247 = arith.addf %244, %246 : vector<8x32xf32>
      %cst_154 = arith.constant 0.000000e+00 : f32
      %248 = vector.broadcast %cst_154 : f32 to vector<8x32xf32>
      %249 = arith.maximumf %247, %248 : vector<8x32xf32>
      %250 = arith.truncf %249 : vector<8x32xf32> to vector<8x32xbf16>
      %c0_155 = arith.constant 0 : index
      %c0_156 = arith.constant 0 : index
      %251 = vector.load %arg17[%c0_155, %c0_156] : memref<64x32xbf16, #tpu.memory_space<vmem>>, vector<32x32xbf16>
      %cst_157 = arith.constant dense<0.000000e+00> : vector<8x32xf32>
      %252 = tpu.matmul %250, %251, %cst_157 {dimension_numbers = #tpu.dot_dimension_numbers<[1], [0], [0], [1], [0, 0, 1, 1], [], []>} : vector<8x32xbf16>, vector<32x32xbf16>, vector<8x32xf32> -> vector<8x32xf32>
      %253 = arith.addf %242, %252 : vector<8x32xf32>
      %c0_158 = arith.constant 0 : index
      %c32 = arith.constant 32 : index
      %254 = vector.load %arg15[%c0_158, %c32] : memref<32x64xbf16, #tpu.memory_space<vmem>>, vector<32x32xbf16>
      %cst_159 = arith.constant dense<0.000000e+00> : vector<8x32xf32>
      %255 = tpu.matmul %241, %254, %cst_159 {dimension_numbers = #tpu.dot_dimension_numbers<[1], [0], [0], [1], [0, 0, 1, 1], [], []>} : vector<8x32xbf16>, vector<32x32xbf16>, vector<8x32xf32> -> vector<8x32xf32>
      %c0_160 = arith.constant 0 : index
      %c32_161 = arith.constant 32 : index
      %256 = vector.load %arg16[%c0_160, %c32_161] : memref<1x64xf32, #tpu.memory_space<vmem>>, vector<1x32xf32>
      %257 = vector.broadcast %256 : vector<1x32xf32> to vector<8x32xf32>
      %258 = arith.addf %255, %257 : vector<8x32xf32>
      %cst_162 = arith.constant 0.000000e+00 : f32
      %259 = vector.broadcast %cst_162 : f32 to vector<8x32xf32>
      %260 = arith.maximumf %258, %259 : vector<8x32xf32>
      %261 = arith.truncf %260 : vector<8x32xf32> to vector<8x32xbf16>
      %c32_163 = arith.constant 32 : index
      %c0_164 = arith.constant 0 : index
      %262 = vector.load %arg17[%c32_163, %c0_164] : memref<64x32xbf16, #tpu.memory_space<vmem>>, vector<32x32xbf16>
      %cst_165 = arith.constant dense<0.000000e+00> : vector<8x32xf32>
      %263 = tpu.matmul %261, %262, %cst_165 {dimension_numbers = #tpu.dot_dimension_numbers<[1], [0], [0], [1], [0, 0, 1, 1], [], []>} : vector<8x32xbf16>, vector<32x32xbf16>, vector<8x32xf32> -> vector<8x32xf32>
      %264 = arith.addf %253, %263 : vector<8x32xf32>
      %c0_166 = arith.constant 0 : index
      %c0_167 = arith.constant 0 : index
      %265 = vector.load %arg18[%c0_166, %c0_167] : memref<1x32xf32, #tpu.memory_space<vmem>>, vector<1x32xf32>
      %266 = vector.broadcast %265 : vector<1x32xf32> to vector<8x32xf32>
      %267 = arith.addf %264, %266 : vector<8x32xf32>
      %268 = arith.addf %240, %267 : vector<8x32xf32>
      %cst_168 = arith.constant dense<0.000000e+00> : vector<8xf32>
      %269 = vector.multi_reduction <add>, %268, %cst_168 [1] : vector<8x32xf32> to vector<8xf32>
      %270 = vector.shape_cast %269 : vector<8xf32> to vector<8x1xf32>
      %cst_169 = arith.constant 3.200000e+01 : f32
      %271 = vector.broadcast %cst_169 : f32 to vector<8x1xf32>
      %272 = arith.divf %270, %271 : vector<8x1xf32>
      %273 = vector.broadcast %272 : vector<8x1xf32> to vector<8x32xf32>
      %274 = arith.subf %268, %273 : vector<8x32xf32>
      %275 = arith.mulf %274, %274 : vector<8x32xf32>
      %cst_170 = arith.constant dense<0.000000e+00> : vector<8xf32>
      %276 = vector.multi_reduction <add>, %275, %cst_170 [1] : vector<8x32xf32> to vector<8xf32>
      %277 = vector.shape_cast %276 : vector<8xf32> to vector<8x1xf32>
      %cst_171 = arith.constant 3.200000e+01 : f32
      %278 = vector.broadcast %cst_171 : f32 to vector<8x1xf32>
      %279 = arith.divf %277, %278 : vector<8x1xf32>
      %280 = vector.broadcast %272 : vector<8x1xf32> to vector<8x32xf32>
      %281 = arith.subf %268, %280 : vector<8x32xf32>
      %cst_172 = arith.constant 9.99999974E-6 : f32
      %282 = vector.broadcast %cst_172 : f32 to vector<8x1xf32>
      %283 = arith.addf %279, %282 : vector<8x1xf32>
      %284 = math.rsqrt %283 : vector<8x1xf32>
      %285 = vector.broadcast %284 : vector<8x1xf32> to vector<8x32xf32>
      %286 = arith.mulf %281, %285 : vector<8x32xf32>
      %c0_173 = arith.constant 0 : index
      %c0_174 = arith.constant 0 : index
      %287 = vector.load %arg19[%c0_173, %c0_174] : memref<1x32xf32, #tpu.memory_space<vmem>>, vector<1x32xf32>
      %288 = vector.broadcast %287 : vector<1x32xf32> to vector<8x32xf32>
      %289 = arith.mulf %286, %288 : vector<8x32xf32>
      %c0_175 = arith.constant 0 : index
      %c0_176 = arith.constant 0 : index
      %290 = vector.load %arg20[%c0_175, %c0_176] : memref<1x32xf32, #tpu.memory_space<vmem>>, vector<1x32xf32>
      %291 = vector.broadcast %290 : vector<1x32xf32> to vector<8x32xf32>
      %292 = arith.addf %289, %291 : vector<8x32xf32>
      %c0_177 = arith.constant 0 : index
      %c0_178 = arith.constant 0 : index
      %c0_179 = arith.constant 0 : index
      %293 = vector.load %arg21[%c0_177, %c0_178, %c0_179] : memref<1x8x32xf32, #tpu.memory_space<vmem>>, vector<1x8x32xf32>
      %294 = vector.shape_cast %293 : vector<1x8x32xf32> to vector<8x32xf32>
      %295 = vector.shape_cast %292 : vector<8x32xf32> to vector<1x8x32xf32>
      tpu.vector_store %arg21[%c0_177, %c0_178, %c0_179], %295 {strides = array<i32>} : memref<1x8x32xf32, #tpu.memory_space<vmem>>, vector<1x8x32xf32>,
    } else {
    }
    return
  }
  func.func @transform_0(%arg0: i32, %arg1: i32, %arg2: i32) -> (i32, i32, i32) {
    %c0_i32 = arith.constant 0 : i32
    %c0_i32_0 = arith.constant 0 : i32
    return %arg0, %arg1, %c0_i32 : i32, i32, i32
  }
  func.func @transform_1(%arg0: i32, %arg1: i32, %arg2: i32) -> (i32, i32, i32) {
    %c0_i32 = arith.constant 0 : i32
    %c0_i32_0 = arith.constant 0 : i32
    return %arg0, %arg2, %c0_i32 : i32, i32, i32
  }
  func.func @transform_2(%arg0: i32, %arg1: i32, %arg2: i32) -> (i32, i32) {
    %c0_i32 = arith.constant 0 : i32
    %c0_i32_0 = arith.constant 0 : i32
    %c0_i32_1 = arith.constant 0 : i32
    return %c0_i32, %c0_i32_0 : i32, i32
  }
  func.func @transform_3(%arg0: i32, %arg1: i32, %arg2: i32) -> (i32, i32) {
    %c0_i32 = arith.constant 0 : i32
    %c0_i32_0 = arith.constant 0 : i32
    %c0_i32_1 = arith.constant 0 : i32
    return %c0_i32, %c0_i32_0 : i32, i32
  }
  func.func @transform_4(%arg0: i32, %arg1: i32, %arg2: i32) -> (i32, i32) {
    %c0_i32 = arith.constant 0 : i32
    %c0_i32_0 = arith.constant 0 : i32
    %c0_i32_1 = arith.constant 0 : i32
    return %c0_i32, %c0_i32_0 : i32, i32
  }
  func.func @transform_5(%arg0: i32, %arg1: i32, %arg2: i32) -> (i32, i32) {
    %c0_i32 = arith.constant 0 : i32
    %c0_i32_0 = arith.constant 0 : i32
    %c0_i32_1 = arith.constant 0 : i32
    return %c0_i32, %c0_i32_0 : i32, i32
  }
  func.func @transform_6(%arg0: i32, %arg1: i32, %arg2: i32) -> (i32, i32) {
    %c0_i32 = arith.constant 0 : i32
    %c0_i32_0 = arith.constant 0 : i32
    %c0_i32_1 = arith.constant 0 : i32
    return %c0_i32, %c0_i32_0 : i32, i32
  }
  func.func @transform_7(%arg0: i32, %arg1: i32, %arg2: i32) -> (i32, i32) {
    %c0_i32 = arith.constant 0 : i32
    %c0_i32_0 = arith.constant 0 : i32
    %c0_i32_1 = arith.constant 0 : i32
    return %c0_i32, %c0_i32_0 : i32, i32
  }
  func.func @transform_8(%arg0: i32, %arg1: i32, %arg2: i32) -> (i32, i32) {
    %c0_i32 = arith.constant 0 : i32
    %c0_i32_0 = arith.constant 0 : i32
    %c0_i32_1 = arith.constant 0 : i32
    return %c0_i32, %c0_i32_0 : i32, i32
  }
  func.func @transform_9(%arg0: i32, %arg1: i32, %arg2: i32) -> (i32, i32) {
    %c0_i32 = arith.constant 0 : i32
    %c0_i32_0 = arith.constant 0 : i32
    %c0_i32_1 = arith.constant 0 : i32
    return %c0_i32, %c0_i32_0 : i32, i32
  }
  func.func @transform_10(%arg0: i32, %arg1: i32, %arg2: i32) -> (i32, i32) {
    %c0_i32 = arith.constant 0 : i32
    %c0_i32_0 = arith.constant 0 : i32
    %c0_i32_1 = arith.constant 0 : i32
    return %c0_i32, %c0_i32_0 : i32, i32
  }
  func.func @transform_11(%arg0: i32, %arg1: i32, %arg2: i32) -> (i32, i32) {
    %c0_i32 = arith.constant 0 : i32
    %c0_i32_0 = arith.constant 0 : i32
    %c0_i32_1 = arith.constant 0 : i32
    return %c0_i32, %c0_i32_0 : i32, i32
  }
  func.func @transform_12(%arg0: i32, %arg1: i32, %arg2: i32) -> (i32, i32) {
    %c0_i32 = arith.constant 0 : i32
    %c0_i32_0 = arith.constant 0 : i32
    %c0_i32_1 = arith.constant 0 : i32
    return %c0_i32, %c0_i32_0 : i32, i32
  }
  func.func @transform_13(%arg0: i32, %arg1: i32, %arg2: i32) -> (i32, i32) {
    %c0_i32 = arith.constant 0 : i32
    %c0_i32_0 = arith.constant 0 : i32
    %c0_i32_1 = arith.constant 0 : i32
    return %c0_i32, %c0_i32_0 : i32, i32
  }
  func.func @transform_14(%arg0: i32, %arg1: i32, %arg2: i32) -> (i32, i32) {
    %c0_i32 = arith.constant 0 : i32
    %c0_i32_0 = arith.constant 0 : i32
    %c0_i32_1 = arith.constant 0 : i32
    return %c0_i32, %c0_i32_0 : i32, i32
  }
  func.func @transform_15(%arg0: i32, %arg1: i32, %arg2: i32) -> (i32, i32) {
    %c0_i32 = arith.constant 0 : i32
    %c0_i32_0 = arith.constant 0 : i32
    %c0_i32_1 = arith.constant 0 : i32
    return %c0_i32, %c0_i32_0 : i32, i32
  }
  func.func @transform_16(%arg0: i32, %arg1: i32, %arg2: i32) -> (i32, i32) {
    %c0_i32 = arith.constant 0 : i32
    %c0_i32_0 = arith.constant 0 : i32
    %c0_i32_1 = arith.constant 0 : i32
    return %c0_i32, %c0_i32_0 : i32, i32
  }
  func.func @transform_17(%arg0: i32, %arg1: i32, %arg2: i32) -> (i32, i32) {
    %c0_i32 = arith.constant 0 : i32
    %c0_i32_0 = arith.constant 0 : i32
    %c0_i32_1 = arith.constant 0 : i32
    return %c0_i32, %c0_i32_0 : i32, i32
  }
  func.func @transform_18(%arg0: i32, %arg1: i32, %arg2: i32) -> (i32, i32, i32) {
    %c0_i32 = arith.constant 0 : i32
    %c0_i32_0 = arith.constant 0 : i32
    return %arg0, %arg1, %c0_i32 : i32, i32, i32
  }
}

</mosaic_0001>

<llo_original>
// kernel: tpu_custom_call.1
$region0: #{tpu_custom_call.1}
  #allocation0 [shape = 'u32[]', space=smem, size = 0x4, offset = 0x4, fixed_abs, tag = 'smem constant byte address 0x4 - core index']
  #allocation1 [shape = 'u32[72,128]{1,0:T(1,128)}', space=vmem, size = 0x9000, scoped, tag = 'internal scratch']
  #allocation2 [shape = 'bf16[8,32]{1,0:T(8,128)(2,1)}', space=vmem, size = 0x800, scoped, tag = 'scratch operand']
  #allocation3 [shape = 'f32[4,8,1]{2,1,0:T(8,128)}', space=vmem, size = 0x4000, scoped, tag = 'scratch operand']
  #allocation4 [shape = 'f32[4,8,1]{2,1,0:T(8,128)}', space=vmem, size = 0x4000, scoped, tag = 'scratch operand']
  #allocation5 [shape = 'f32[4,8,8]{2,1,0:T(8,128)}', space=vmem, size = 0x4000, scoped, tag = 'scratch operand']
  %s0 = inlined_call_operand.vmem [shape: f32[2,16,32], index: 0, kind: input, shape index: {}]
  %s1 = inlined_call_operand.hbm [shape: f32[2,16,32], index: 1, kind: input, shape index: {}]
  %s2 = inlined_call_operand.vmem [shape: bf16[32,32], index: 2, kind: input, shape index: {}]
  %s3 = inlined_call_operand.vmem [shape: f32[1,32], index: 3, kind: input, shape index: {}]
  %s4 = inlined_call_operand.hbm [shape: bf16[32,32], index: 4, kind: input, shape index: {}]
  %s5 = inlined_call_operand.vmem [shape: f32[1,32], index: 5, kind: input, shape index: {}]
  %s6 = inlined_call_operand.hbm [shape: bf16[32,32], index: 6, kind: input, shape index: {}]
  %s7 = inlined_call_operand.vmem [shape: f32[1,32], index: 7, kind: input, shape index: {}]
  %s8 = inlined_call_operand.hbm [shape: bf16[32,32], index: 8, kind: input, shape index: {}]
  %s9 = inlined_call_operand.vmem [shape: f32[1,32], index: 9, kind: input, shape index: {}]
  %s10 = inlined_call_operand.vmem [shape: f32[1,32], index: 10, kind: input, shape index: {}]
  %s11 = inlined_call_operand.vmem [shape: f32[1,32], index: 11, kind: input, shape index: {}]
  %s12 = inlined_call_operand.hbm [shape: bf16[32,64], index: 12, kind: input, shape index: {}]
  %s13 = inlined_call_operand.vmem [shape: f32[1,64], index: 13, kind: input, shape index: {}]
  %s14 = inlined_call_operand.vmem [shape: bf16[64,32], index: 14, kind: input, shape index: {}]
  %s15 = inlined_call_operand.vmem [shape: f32[1,32], index: 15, kind: input, shape index: {}]
  %s16 = inlined_call_operand.vmem [shape: f32[1,32], index: 16, kind: input, shape index: {}]
  %s17 = inlined_call_operand.vmem [shape: f32[1,32], index: 17, kind: input, shape index: {}]
  %s18 = inlined_call_operand.hbm [shape: f32[2,16,32], index: 18, kind: output, shape index: {}]
  %s19 = sld [smem:[#allocation0]]
  $region133: #{tpu_custom_call.1} parent=0
    _
  %s21 = ssub.s32 1, %s19
  %s22 = scalar_select 0, %s21, %s19
  $region1: #{tpu_custom_call.1} parent=0
    #allocation6 [shape = 'u8[8192]{0}', space=vmem, size = 0x2000, scoped, tag = 'input window, operand 1']
    #allocation7 [shape = 's32[2]{0}', space=sflag, size = 0x8, scoped, tag = 'scoped memory for tpu_custom_call.1']
    #allocation8 [shape = 's32[2]{0}', space=sflag, size = 0x8, scoped, tag = 'scoped memory for tpu_custom_call.1']
    #allocation9 [shape = 'u8[8192]{0}', space=vmem, size = 0x2000, scoped, tag = 'input window, operand 4, single buffered']
    #allocation10 [shape = 's32[1]{0}', space=sflag, size = 0x4, scoped, tag = 'scoped memory for tpu_custom_call.1']
    #allocation11 [shape = 'u8[8192]{0}', space=vmem, size = 0x2000, scoped, tag = 'input window, operand 6, single buffered']
    #allocation12 [shape = 'u8[8192]{0}', space=vmem, size = 0x2000, scoped, tag = 'input window, operand 8, single buffered']
    #allocation13 [shape = 's32[1]{0}', space=sflag, size = 0x4, scoped, tag = 'scoped memory for tpu_custom_call.1']
    #allocation14 [shape = 'u8[8192]{0}', space=vmem, size = 0x2000, scoped, tag = 'input window, operand 12, single buffered']
    #allocation15 [shape = 'u8[8192]{0}', space=vmem, size = 0x2000, scoped, tag = 'output window, operand 0']
    %23 = vsyncpa [#allocation7], 0
    %s24 = scalar_lea.sflag [#allocation7], 1
    %25 = vsyncpa %s24, 0
    %26 = vsyncpa [#allocation10], 0
    %27 = vsyncpa [#allocation13], 0
    %28 = vsyncpa [#allocation8], 0
    %s29 = scalar_lea.sflag [#allocation8], 1
    %30 = vsyncpa %s29, 0
    loop: start=0, step=1, limit=10
    $region2: #{tpu_custom_call.1} parent=1 // loop_pre_header
      _
    $region3: #{tpu_custom_call.1} parent=1 // loop_header
      %s32 = sphi 0, %s36
      %p33 = scmp.ge.s32.totalorder %s32, 10
      %s39 = sphi 0, %s58
      %s40 = sphi 0, %s54
      %s41 = sphi 0, %s50
      %s42 = sphi 0, %s39
      %s43 = sphi 0, %s40
      %s44 = sphi 0, %s41
      %s45 = sphi 0, %s42
      %s46 = sphi 0, %s43
      %s47 = sphi 0, %s44
      %s63 = sphi 0, %s65
      %s66 = sphi 0, %s63
      %s67 = sphi 0, %s66
      %s83 = sphi 0, %s67
      %s91 = sphi 0, %s93
      %s94 = sphi 0, %s91
      %s95 = sphi 0, %s94
      %s111 = sphi 0, %s95
      %s115 = sphi 0, %s115
      %s117 = sphi 0, %s115
      %s118 = sphi 0, %s117
      %s132 = sphi 0, %s118
      %s136 = sphi 0, %s136
      %s138 = sphi 0, %s136
      %s139 = sphi 0, %s138
      %s153 = sphi 0, %s139
      %s157 = sphi 0, %s157
      %s159 = sphi 0, %s157
      %s160 = sphi 0, %s159
      %s174 = sphi 0, %s160
      %s178 = sphi 0, %s178
      %s180 = sphi 0, %s178
      %s181 = sphi 0, %s180
      %s195 = sphi 0, %s181
      %s199 = sphi 0, %s199
      %s201 = sphi 0, %s199
      %s202 = sphi 0, %s201
      %s216 = sphi 0, %s202
      %s220 = sphi 0, %s220
      %s222 = sphi 0, %s220
      %s223 = sphi 0, %s222
      %s237 = sphi 0, %s223
      %s241 = sphi 0, %s241
      %s243 = sphi 0, %s241
      %s244 = sphi 0, %s243
      %s258 = sphi 0, %s244
      %s262 = sphi 0, %s262
      %s264 = sphi 0, %s262
      %s265 = sphi 0, %s264
      %s279 = sphi 0, %s265
      %s283 = sphi 0, %s283
      %s285 = sphi 0, %s283
      %s286 = sphi 0, %s285
      %s300 = sphi 0, %s286
      %s304 = sphi 0, %s304
      %s306 = sphi 0, %s304
      %s307 = sphi 0, %s306
      %s321 = sphi 0, %s307
      %s325 = sphi 0, %s325
      %s327 = sphi 0, %s325
      %s328 = sphi 0, %s327
      %s342 = sphi 0, %s328
      %s346 = sphi 0, %s346
      %s348 = sphi 0, %s346
      %s349 = sphi 0, %s348
      %s363 = sphi 0, %s349
      %s367 = sphi 0, %s367
      %s369 = sphi 0, %s367
      %s370 = sphi 0, %s369
      %s384 = sphi 0, %s370
      %s388 = sphi 0, %s388
      %s390 = sphi 0, %s388
      %s391 = sphi 0, %s390
      %s405 = sphi 0, %s391
      %s409 = sphi 0, %s409
      %s411 = sphi 0, %s409
      %s412 = sphi 0, %s411
      %s426 = sphi 0, %s412
      %s430 = sphi 0, %s430
      %s432 = sphi 0, %s430
      %s433 = sphi 0, %s432
      %s447 = sphi 0, %s433
      %s455 = sphi 0, %s457
      %s458 = sphi 0, %s455
      %s459 = sphi 0, %s458
      %s475 = sphi 0, %s459
    $region4: #{tpu_custom_call.1} parent=1 // loop_header_branch
      %35 = sbr.rel (%p33) target = $region8
    $region5: #{tpu_custom_call.1} parent=1 // loop_body
      %s37 = ssub.s32 %s32, 1
      %s38 = ssub.s32 %s32, 2
      %s48 = sadd.s32 1, %s41
      %p49 = scmp.ge.s32.totalorder %s48, 2
      %s50 = scalar_select %p49, 0, %s48
      %s51 = sadd.s32 1, %s40
      %s52 = scalar_select %p49, %s51, %s40
      %p53 = scmp.ge.s32.totalorder %s52, 2
      %s54 = scalar_select %p53, 0, %s52
      %s55 = sadd.s32 1, %s39
      %s56 = scalar_select %p53, %s55, %s39
      %p57 = scmp.ge.s32.totalorder %s56, 2
      %s58 = scalar_select %p57, 0, %s56
      %s59 = ssub.s32 %s39, %s58
      %s60 = ssub.s32 %s40, %s54
      %s61 = sor.u32 %s59, %s60
      %p62 = scmp.eq.s32.totalorder %s61, 0
      %s64 = sadd.s32 %s63, 1
      %s65 = scalar_select %p62, %s63, %s64
      %p68 = pneg %p62
      %p69 = scmp.eq.s32.totalorder %s32, 7
      %p70 = por %p68, %p69
      %p71 = scmp.ne.s32.totalorder %s63, %s66
      %p72 = scmp.eq.s32.totalorder %s32, 0
      %p73 = por %p71, %p72
      %p74 = scmp.ne.s32.totalorder %s63, %s66
      %p75 = scmp.eq.s32.totalorder %s37, 7
      %p76 = por %p74, %p75
      %p77 = scmp.ne.s32.totalorder %s66, %s67
      %p78 = scmp.eq.s32.totalorder %s37, 0
      %p79 = por %p77, %p78
      %p80 = scmp.ne.s32.totalorder %s66, %s67
      %p81 = scmp.eq.s32.totalorder %s38, 7
      %p82 = por %p80, %p81
      %p84 = scmp.ne.s32.totalorder %s67, %s83
      %p85 = scmp.eq.s32.totalorder %s38, 0
      %p86 = por %p84, %p85
      %s87 = ssub.s32 %s39, %s58
      %s88 = ssub.s32 %s41, %s50
      %s89 = sor.u32 %s87, %s88
      %p90 = scmp.eq.s32.totalorder %s89, 0
      %s92 = sadd.s32 %s91, 1
      %s93 = scalar_select %p90, %s91, %s92
      %p96 = pneg %p90
      %p97 = scmp.eq.s32.totalorder %s32, 7
      %p98 = por %p96, %p97
      %p99 = scmp.ne.s32.totalorder %s91, %s94
      %p100 = scmp.eq.s32.totalorder %s32, 0
      %p101 = por %p99, %p100
      %p102 = scmp.ne.s32.totalorder %s91, %s94
      %p103 = scmp.eq.s32.totalorder %s37, 7
      %p104 = por %p102, %p103
      %p105 = scmp.ne.s32.totalorder %s94, %s95
      %p106 = scmp.eq.s32.totalorder %s37, 0
      %p107 = por %p105, %p106
      %p108 = scmp.ne.s32.totalorder %s94, %s95
      %p109 = scmp.eq.s32.totalorder %s38, 7
      %p110 = por %p108, %p109
      %p112 = scmp.ne.s32.totalorder %s95, %s111
      %p113 = scmp.eq.s32.totalorder %s38, 0
      %p114 = por %p112, %p113
      %s116 = sadd.s32 %s115, 1
      %p119 = scmp.eq.s32.totalorder %s32, 7
      %p120 = scmp.ne.s32.totalorder %s115, %s117
      %p121 = scmp.eq.s32.totalorder %s32, 0
      %p122 = por %p120, %p121
      %p123 = scmp.ne.s32.totalorder %s115, %s117
      %p124 = scmp.eq.s32.totalorder %s37, 7
      %p125 = por %p123, %p124
      %p126 = scmp.ne.s32.totalorder %s117, %s118
      %p127 = scmp.eq.s32.totalorder %s37, 0
      %p128 = por %p126, %p127
      %p129 = scmp.ne.s32.totalorder %s117, %s118
      %p130 = scmp.eq.s32.totalorder %s38, 7
      %p131 = por %p129, %p130
      %p133 = scmp.ne.s32.totalorder %s118, %s132
      %p134 = scmp.eq.s32.totalorder %s38, 0
      %p135 = por %p133, %p134
      %s137 = sadd.s32 %s136, 1
      %p140 = scmp.eq.s32.totalorder %s32, 7
      %p141 = scmp.ne.s32.totalorder %s136, %s138
      %p142 = scmp.eq.s32.totalorder %s32, 0
      %p143 = por %p141, %p142
      %p144 = scmp.ne.s32.totalorder %s136, %s138
      %p145 = scmp.eq.s32.totalorder %s37, 7
      %p146 = por %p144, %p145
      %p147 = scmp.ne.s32.totalorder %s138, %s139
      %p148 = scmp.eq.s32.totalorder %s37, 0
      %p149 = por %p147, %p148
      %p150 = scmp.ne.s32.totalorder %s138, %s139
      %p151 = scmp.eq.s32.totalorder %s38, 7
      %p152 = por %p150, %p151
      %p154 = scmp.ne.s32.totalorder %s139, %s153
      %p155 = scmp.eq.s32.totalorder %s38, 0
      %p156 = por %p154, %p155
      %s158 = sadd.s32 %s157, 1
      %p161 = scmp.eq.s32.totalorder %s32, 7
      %p162 = scmp.ne.s32.totalorder %s157, %s159
      %p163 = scmp.eq.s32.totalorder %s32, 0
      %p164 = por %p162, %p163
      %p165 = scmp.ne.s32.totalorder %s157, %s159
      %p166 = scmp.eq.s32.totalorder %s37, 7
      %p167 = por %p165, %p166
      %p168 = scmp.ne.s32.totalorder %s159, %s160
      %p169 = scmp.eq.s32.totalorder %s37, 0
      %p170 = por %p168, %p169
      %p171 = scmp.ne.s32.totalorder %s159, %s160
      %p172 = scmp.eq.s32.totalorder %s38, 7
      %p173 = por %p171, %p172
      %p175 = scmp.ne.s32.totalorder %s160, %s174
      %p176 = scmp.eq.s32.totalorder %s38, 0
      %p177 = por %p175, %p176
      %s179 = sadd.s32 %s178, 1
      %p182 = scmp.eq.s32.totalorder %s32, 7
      %p183 = scmp.ne.s32.totalorder %s178, %s180
      %p184 = scmp.eq.s32.totalorder %s32, 0
      %p185 = por %p183, %p184
      %p186 = scmp.ne.s32.totalorder %s178, %s180
      %p187 = scmp.eq.s32.totalorder %s37, 7
      %p188 = por %p186, %p187
      %p189 = scmp.ne.s32.totalorder %s180, %s181
      %p190 = scmp.eq.s32.totalorder %s37, 0
      %p191 = por %p189, %p190
      %p192 = scmp.ne.s32.totalorder %s180, %s181
      %p193 = scmp.eq.s32.totalorder %s38, 7
      %p194 = por %p192, %p193
      %p196 = scmp.ne.s32.totalorder %s181, %s195
      %p197 = scmp.eq.s32.totalorder %s38, 0
      %p198 = por %p196, %p197
      %s200 = sadd.s32 %s199, 1
      %p203 = scmp.eq.s32.totalorder %s32, 7
      %p204 = scmp.ne.s32.totalorder %s199, %s201
      %p205 = scmp.eq.s32.totalorder %s32, 0
      %p206 = por %p204, %p205
      %p207 = scmp.ne.s32.totalorder %s199, %s201
      %p208 = scmp.eq.s32.totalorder %s37, 7
      %p209 = por %p207, %p208
      %p210 = scmp.ne.s32.totalorder %s201, %s202
      %p211 = scmp.eq.s32.totalorder %s37, 0
      %p212 = por %p210, %p211
      %p213 = scmp.ne.s32.totalorder %s201, %s202
      %p214 = scmp.eq.s32.totalorder %s38, 7
      %p215 = por %p213, %p214
      %p217 = scmp.ne.s32.totalorder %s202, %s216
      %p218 = scmp.eq.s32.totalorder %s38, 0
      %p219 = por %p217, %p218
      %s221 = sadd.s32 %s220, 1
      %p224 = scmp.eq.s32.totalorder %s32, 7
      %p225 = scmp.ne.s32.totalorder %s220, %s222
      %p226 = scmp.eq.s32.totalorder %s32, 0
      %p227 = por %p225, %p226
      %p228 = scmp.ne.s32.totalorder %s220, %s222
      %p229 = scmp.eq.s32.totalorder %s37, 7
      %p230 = por %p228, %p229
      %p231 = scmp.ne.s32.totalorder %s222, %s223
      %p232 = scmp.eq.s32.totalorder %s37, 0
      %p233 = por %p231, %p232
      %p234 = scmp.ne.s32.totalorder %s222, %s223
      %p235 = scmp.eq.s32.totalorder %s38, 7
      %p236 = por %p234, %p235
      %p238 = scmp.ne.s32.totalorder %s223, %s237
      %p239 = scmp.eq.s32.totalorder %s38, 0
      %p240 = por %p238, %p239
      %s242 = sadd.s32 %s241, 1
      %p245 = scmp.eq.s32.totalorder %s32, 7
      %p246 = scmp.ne.s32.totalorder %s241, %s243
      %p247 = scmp.eq.s32.totalorder %s32, 0
      %p248 = por %p246, %p247
      %p249 = scmp.ne.s32.totalorder %s241, %s243
      %p250 = scmp.eq.s32.totalorder %s37, 7
      %p251 = por %p249, %p250
      %p252 = scmp.ne.s32.totalorder %s243, %s244
      %p253 = scmp.eq.s32.totalorder %s37, 0
      %p254 = por %p252, %p253
      %p255 = scmp.ne.s32.totalorder %s243, %s244
      %p256 = scmp.eq.s32.totalorder %s38, 7
      %p257 = por %p255, %p256
      %p259 = scmp.ne.s32.totalorder %s244, %s258
      %p260 = scmp.eq.s32.totalorder %s38, 0
      %p261 = por %p259, %p260
      %s263 = sadd.s32 %s262, 1
      %p266 = scmp.eq.s32.totalorder %s32, 7
      %p267 = scmp.ne.s32.totalorder %s262, %s264
      %p268 = scmp.eq.s32.totalorder %s32, 0
      %p269 = por %p267, %p268
      %p270 = scmp.ne.s32.totalorder %s262, %s264
      %p271 = scmp.eq.s32.totalorder %s37, 7
      %p272 = por %p270, %p271
      %p273 = scmp.ne.s32.totalorder %s264, %s265
      %p274 = scmp.eq.s32.totalorder %s37, 0
      %p275 = por %p273, %p274
      %p276 = scmp.ne.s32.totalorder %s264, %s265
      %p277 = scmp.eq.s32.totalorder %s38, 7
      %p278 = por %p276, %p277
      %p280 = scmp.ne.s32.totalorder %s265, %s279
      %p281 = scmp.eq.s32.totalorder %s38, 0
      %p282 = por %p280, %p281
      %s284 = sadd.s32 %s283, 1
      %p287 = scmp.eq.s32.totalorder %s32, 7
      %p288 = scmp.ne.s32.totalorder %s283, %s285
      %p289 = scmp.eq.s32.totalorder %s32, 0
      %p290 = por %p288, %p289
      %p291 = scmp.ne.s32.totalorder %s283, %s285
      %p292 = scmp.eq.s32.totalorder %s37, 7
      %p293 = por %p291, %p292
      %p294 = scmp.ne.s32.totalorder %s285, %s286
      %p295 = scmp.eq.s32.totalorder %s37, 0
      %p296 = por %p294, %p295
      %p297 = scmp.ne.s32.totalorder %s285, %s286
      %p298 = scmp.eq.s32.totalorder %s38, 7
      %p299 = por %p297, %p298
      %p301 = scmp.ne.s32.totalorder %s286, %s300
      %p302 = scmp.eq.s32.totalorder %s38, 0
      %p303 = por %p301, %p302
      %s305 = sadd.s32 %s304, 1
      %p308 = scmp.eq.s32.totalorder %s32, 7
      %p309 = scmp.ne.s32.totalorder %s304, %s306
      %p310 = scmp.eq.s32.totalorder %s32, 0
      %p311 = por %p309, %p310
      %p312 = scmp.ne.s32.totalorder %s304, %s306
      %p313 = scmp.eq.s32.totalorder %s37, 7
      %p314 = por %p312, %p313
      %p315 = scmp.ne.s32.totalorder %s306, %s307
      %p316 = scmp.eq.s32.totalorder %s37, 0
      %p317 = por %p315, %p316
      %p318 = scmp.ne.s32.totalorder %s306, %s307
      %p319 = scmp.eq.s32.totalorder %s38, 7
      %p320 = por %p318, %p319
      %p322 = scmp.ne.s32.totalorder %s307, %s321
      %p323 = scmp.eq.s32.totalorder %s38, 0
      %p324 = por %p322, %p323
      %s326 = sadd.s32 %s325, 1
      %p329 = scmp.eq.s32.totalorder %s32, 7
      %p330 = scmp.ne.s32.totalorder %s325, %s327
      %p331 = scmp.eq.s32.totalorder %s32, 0
      %p332 = por %p330, %p331
      %p333 = scmp.ne.s32.totalorder %s325, %s327
      %p334 = scmp.eq.s32.totalorder %s37, 7
      %p335 = por %p333, %p334
      %p336 = scmp.ne.s32.totalorder %s327, %s328
      %p337 = scmp.eq.s32.totalorder %s37, 0
      %p338 = por %p336, %p337
      %p339 = scmp.ne.s32.totalorder %s327, %s328
      %p340 = scmp.eq.s32.totalorder %s38, 7
      %p341 = por %p339, %p340
      %p343 = scmp.ne.s32.totalorder %s328, %s342
      %p344 = scmp.eq.s32.totalorder %s38, 0
      %p345 = por %p343, %p344
      %s347 = sadd.s32 %s346, 1
      %p350 = scmp.eq.s32.totalorder %s32, 7
      %p351 = scmp.ne.s32.totalorder %s346, %s348
      %p352 = scmp.eq.s32.totalorder %s32, 0
      %p353 = por %p351, %p352
      %p354 = scmp.ne.s32.totalorder %s346, %s348
      %p355 = scmp.eq.s32.totalorder %s37, 7
      %p356 = por %p354, %p355
      %p357 = scmp.ne.s32.totalorder %s348, %s349
      %p358 = scmp.eq.s32.totalorder %s37, 0
      %p359 = por %p357, %p358
      %p360 = scmp.ne.s32.totalorder %s348, %s349
      %p361 = scmp.eq.s32.totalorder %s38, 7
      %p362 = por %p360, %p361
      %p364 = scmp.ne.s32.totalorder %s349, %s363
      %p365 = scmp.eq.s32.totalorder %s38, 0
      %p366 = por %p364, %p365
      %s368 = sadd.s32 %s367, 1
      %p371 = scmp.eq.s32.totalorder %s32, 7
      %p372 = scmp.ne.s32.totalorder %s367, %s369
      %p373 = scmp.eq.s32.totalorder %s32, 0
      %p374 = por %p372, %p373
      %p375 = scmp.ne.s32.totalorder %s367, %s369
      %p376 = scmp.eq.s32.totalorder %s37, 7
      %p377 = por %p375, %p376
      %p378 = scmp.ne.s32.totalorder %s369, %s370
      %p379 = scmp.eq.s32.totalorder %s37, 0
      %p380 = por %p378, %p379
      %p381 = scmp.ne.s32.totalorder %s369, %s370
      %p382 = scmp.eq.s32.totalorder %s38, 7
      %p383 = por %p381, %p382
      %p385 = scmp.ne.s32.totalorder %s370, %s384
      %p386 = scmp.eq.s32.totalorder %s38, 0
      %p387 = por %p385, %p386
      %s389 = sadd.s32 %s388, 1
      %p392 = scmp.eq.s32.totalorder %s32, 7
      %p393 = scmp.ne.s32.totalorder %s388, %s390
      %p394 = scmp.eq.s32.totalorder %s32, 0
      %p395 = por %p393, %p394
      %p396 = scmp.ne.s32.totalorder %s388, %s390
      %p397 = scmp.eq.s32.totalorder %s37, 7
      %p398 = por %p396, %p397
      %p399 = scmp.ne.s32.totalorder %s390, %s391
      %p400 = scmp.eq.s32.totalorder %s37, 0
      %p401 = por %p399, %p400
      %p402 = scmp.ne.s32.totalorder %s390, %s391
      %p403 = scmp.eq.s32.totalorder %s38, 7
      %p404 = por %p402, %p403
      %p406 = scmp.ne.s32.totalorder %s391, %s405
      %p407 = scmp.eq.s32.totalorder %s38, 0
      %p408 = por %p406, %p407
      %s410 = sadd.s32 %s409, 1
      %p413 = scmp.eq.s32.totalorder %s32, 7
      %p414 = scmp.ne.s32.totalorder %s409, %s411
      %p415 = scmp.eq.s32.totalorder %s32, 0
      %p416 = por %p414, %p415
      %p417 = scmp.ne.s32.totalorder %s409, %s411
      %p418 = scmp.eq.s32.totalorder %s37, 7
      %p419 = por %p417, %p418
      %p420 = scmp.ne.s32.totalorder %s411, %s412
      %p421 = scmp.eq.s32.totalorder %s37, 0
      %p422 = por %p420, %p421
      %p423 = scmp.ne.s32.totalorder %s411, %s412
      %p424 = scmp.eq.s32.totalorder %s38, 7
      %p425 = por %p423, %p424
      %p427 = scmp.ne.s32.totalorder %s412, %s426
      %p428 = scmp.eq.s32.totalorder %s38, 0
      %p429 = por %p427, %p428
      %s431 = sadd.s32 %s430, 1
      %p434 = scmp.eq.s32.totalorder %s32, 7
      %p435 = scmp.ne.s32.totalorder %s430, %s432
      %p436 = scmp.eq.s32.totalorder %s32, 0
      %p437 = por %p435, %p436
      %p438 = scmp.ne.s32.totalorder %s430, %s432
      %p439 = scmp.eq.s32.totalorder %s37, 7
      %p440 = por %p438, %p439
      %p441 = scmp.ne.s32.totalorder %s432, %s433
      %p442 = scmp.eq.s32.totalorder %s37, 0
      %p443 = por %p441, %p442
      %p444 = scmp.ne.s32.totalorder %s432, %s433
      %p445 = scmp.eq.s32.totalorder %s38, 7
      %p446 = por %p444, %p445
      %p448 = scmp.ne.s32.totalorder %s433, %s447
      %p449 = scmp.eq.s32.totalorder %s38, 0
      %p450 = por %p448, %p449
      %s451 = ssub.s32 %s39, %s58
      %s452 = ssub.s32 %s40, %s54
      %s453 = sor.u32 %s451, %s452
      %p454 = scmp.eq.s32.totalorder %s453, 0
      %s456 = sadd.s32 %s455, 1
      %s457 = scalar_select %p454, %s455, %s456
      %p460 = pneg %p454
      %p461 = scmp.eq.s32.totalorder %s32, 7
      %p462 = por %p460, %p461
      %p463 = scmp.ne.s32.totalorder %s455, %s458
      %p464 = scmp.eq.s32.totalorder %s32, 0
      %p465 = por %p463, %p464
      %p466 = scmp.ne.s32.totalorder %s455, %s458
      %p467 = scmp.eq.s32.totalorder %s37, 7
      %p468 = por %p466, %p467
      %p469 = scmp.ne.s32.totalorder %s458, %s459
      %p470 = scmp.eq.s32.totalorder %s37, 0
      %p471 = por %p469, %p470
      %p472 = scmp.ne.s32.totalorder %s458, %s459
      %p473 = scmp.eq.s32.totalorder %s38, 7
      %p474 = por %p472, %p473
      %p476 = scmp.ne.s32.totalorder %s459, %s475
      %p477 = scmp.eq.s32.totalorder %s38, 0
      %p478 = por %p476, %p477
      %p479 = scmp.le.s32.totalorder 1, %s32
      %p480 = scmp.lt.s32.totalorder %s32, 9
      %p481 = pnand %p479, %p480
      %p482 = pneg %p481
      // Predicated region
      $region9: #{tpu_custom_call.1} parent=5 // pred_check
        _
      $region10: #{tpu_custom_call.1} parent=5 // pred_check_branch
        %484 = sbr.rel (%p481) target = $region12
      $region11: #{tpu_custom_call.1} parent=5 // pred_region
        %s485 = ssub.s32 %s32, 1
        // Predicated region
        $region13: #{tpu_custom_call.1} parent=11 // pred_check
          %p486 = pneg %p128
        $region14: #{tpu_custom_call.1} parent=11 // pred_check_branch
          %488 = sbr.rel (%p486) target = $region16
        $region15: #{tpu_custom_call.1} parent=11 // pred_region
          _
        $region16: #{tpu_custom_call.1} parent=11 // pred_fallthru
          _
        // Predicated region
        $region17: #{tpu_custom_call.1} parent=11 // pred_check
          %p489 = pneg %p149
        $region18: #{tpu_custom_call.1} parent=11 // pred_check_branch
          %491 = sbr.rel (%p489) target = $region20
        $region19: #{tpu_custom_call.1} parent=11 // pred_region
          _
        $region20: #{tpu_custom_call.1} parent=11 // pred_fallthru
          _
        // Predicated region
        $region21: #{tpu_custom_call.1} parent=11 // pred_check
          %p492 = pneg %p170
        $region22: #{tpu_custom_call.1} parent=11 // pred_check_branch
          %494 = sbr.rel (%p492) target = $region24
        $region23: #{tpu_custom_call.1} parent=11 // pred_region
          %496 = vsyncadd [#allocation10], 0
          %s497 = sshll.u32 %s4, 4
          %s498 = int_to_ptr.hbm [resolvable:$true] %s497
          %s499 = sshll.u32 [#allocation9], 4
          %s500 = int_to_ptr.vmem [resolvable:$true] %s499
          %505 = dma.hbm_to_vmem [thread:$0]  %s498, 256, %s500, [#allocation10], 64, 64, 4
        $region24: #{tpu_custom_call.1} parent=11 // pred_fallthru
          _
        // Predicated region
        $region25: #{tpu_custom_call.1} parent=11 // pred_check
          %p506 = pneg %p191
        $region26: #{tpu_custom_call.1} parent=11 // pred_check_branch
          %508 = sbr.rel (%p506) target = $region28
        $region27: #{tpu_custom_call.1} parent=11 // pred_region
          _
        $region28: #{tpu_custom_call.1} parent=11 // pred_fallthru
          _
        // Predicated region
        $region29: #{tpu_custom_call.1} parent=11 // pred_check
          %p509 = pneg %p212
        $region30: #{tpu_custom_call.1} parent=11 // pred_check_branch
          %511 = sbr.rel (%p509) target = $region32
        $region31: #{tpu_custom_call.1} parent=11 // pred_region
          %513 = vsyncadd [#allocation10], 0
          %s514 = sshll.u32 %s6, 4
          %s515 = int_to_ptr.hbm [resolvable:$true] %s514
          %s516 = sshll.u32 [#allocation11], 4
          %s517 = int_to_ptr.vmem [resolvable:$true] %s516
          %522 = dma.hbm_to_vmem [thread:$0]  %s515, 256, %s517, [#allocation10], 64, 64, 4
        $region32: #{tpu_custom_call.1} parent=11 // pred_fallthru
          _
        // Predicated region
        $region33: #{tpu_custom_call.1} parent=11 // pred_check
          %p523 = pneg %p233
        $region34: #{tpu_custom_call.1} parent=11 // pred_check_branch
          %525 = sbr.rel (%p523) target = $region36
        $region35: #{tpu_custom_call.1} parent=11 // pred_region
          _
        $region36: #{tpu_custom_call.1} parent=11 // pred_fallthru
          _
        // Predicated region
        $region37: #{tpu_custom_call.1} parent=11 // pred_check
          %p526 = pneg %p254
        $region38: #{tpu_custom_call.1} parent=11 // pred_check_branch
          %528 = sbr.rel (%p526) target = $region40
        $region39: #{tpu_custom_call.1} parent=11 // pred_region
          %530 = vsyncadd [#allocation13], 0
          %s531 = sshll.u32 %s8, 4
          %s532 = int_to_ptr.hbm [resolvable:$true] %s531
          %s533 = sshll.u32 [#allocation12], 4
          %s534 = int_to_ptr.vmem [resolvable:$true] %s533
          %539 = dma.hbm_to_vmem [thread:$0]  %s532, 256, %s534, [#allocation13], 64, 64, 4
        $region40: #{tpu_custom_call.1} parent=11 // pred_fallthru
          _
        // Predicated region
        $region41: #{tpu_custom_call.1} parent=11 // pred_check
          %p540 = pneg %p275
        $region42: #{tpu_custom_call.1} parent=11 // pred_check_branch
          %542 = sbr.rel (%p540) target = $region44
        $region43: #{tpu_custom_call.1} parent=11 // pred_region
          _
        $region44: #{tpu_custom_call.1} parent=11 // pred_fallthru
          _
        // Predicated region
        $region45: #{tpu_custom_call.1} parent=11 // pred_check
          %p543 = pneg %p296
        $region46: #{tpu_custom_call.1} parent=11 // pred_check_branch
          %545 = sbr.rel (%p543) target = $region48
        $region47: #{tpu_custom_call.1} parent=11 // pred_region
          _
        $region48: #{tpu_custom_call.1} parent=11 // pred_fallthru
          _
        // Predicated region
        $region49: #{tpu_custom_call.1} parent=11 // pred_check
          %p546 = pneg %p317
        $region50: #{tpu_custom_call.1} parent=11 // pred_check_branch
          %548 = sbr.rel (%p546) target = $region52
        $region51: #{tpu_custom_call.1} parent=11 // pred_region
          _
        $region52: #{tpu_custom_call.1} parent=11 // pred_fallthru
          _
        // Predicated region
        $region53: #{tpu_custom_call.1} parent=11 // pred_check
          %p549 = pneg %p338
        $region54: #{tpu_custom_call.1} parent=11 // pred_check_branch
          %551 = sbr.rel (%p549) target = $region56
        $region55: #{tpu_custom_call.1} parent=11 // pred_region
          %553 = vsyncadd [#allocation13], 0
          %s554 = sshll.u32 %s12, 4
          %s555 = int_to_ptr.hbm [resolvable:$true] %s554
          %s556 = sshll.u32 [#allocation14], 4
          %s557 = int_to_ptr.vmem [resolvable:$true] %s556
          %562 = dma.hbm_to_vmem [thread:$0]  %s555, 256, %s557, [#allocation13], 64, 64, 4
        $region56: #{tpu_custom_call.1} parent=11 // pred_fallthru
          _
        // Predicated region
        $region57: #{tpu_custom_call.1} parent=11 // pred_check
          %p563 = pneg %p359
        $region58: #{tpu_custom_call.1} parent=11 // pred_check_branch
          %565 = sbr.rel (%p563) target = $region60
        $region59: #{tpu_custom_call.1} parent=11 // pred_region
          _
        $region60: #{tpu_custom_call.1} parent=11 // pred_fallthru
          _
        // Predicated region
        $region61: #{tpu_custom_call.1} parent=11 // pred_check
          %p566 = pneg %p380
        $region62: #{tpu_custom_call.1} parent=11 // pred_check_branch
          %568 = sbr.rel (%p566) target = $region64
        $region63: #{tpu_custom_call.1} parent=11 // pred_region
          _
        $region64: #{tpu_custom_call.1} parent=11 // pred_fallthru
          _
        // Predicated region
        $region65: #{tpu_custom_call.1} parent=11 // pred_check
          %p569 = pneg %p401
        $region66: #{tpu_custom_call.1} parent=11 // pred_check_branch
          %571 = sbr.rel (%p569) target = $region68
        $region67: #{tpu_custom_call.1} parent=11 // pred_region
          _
        $region68: #{tpu_custom_call.1} parent=11 // pred_fallthru
          _
        // Predicated region
        $region69: #{tpu_custom_call.1} parent=11 // pred_check
          %p572 = pneg %p422
        $region70: #{tpu_custom_call.1} parent=11 // pred_check_branch
          %574 = sbr.rel (%p572) target = $region72
        $region71: #{tpu_custom_call.1} parent=11 // pred_region
          _
        $region72: #{tpu_custom_call.1} parent=11 // pred_fallthru
          _
        // Predicated region
        $region73: #{tpu_custom_call.1} parent=11 // pred_check
          %p575 = pneg %p443
        $region74: #{tpu_custom_call.1} parent=11 // pred_check_branch
          %577 = sbr.rel (%p575) target = $region76
        $region75: #{tpu_custom_call.1} parent=11 // pred_region
          _
        $region76: #{tpu_custom_call.1} parent=11 // pred_fallthru
          _
      $region12: #{tpu_custom_call.1} parent=5 // pred_fallthru
        _
      %p578 = scmp.lt.s32.totalorder %s32, 8
      // Predicated region
      $region77: #{tpu_custom_call.1} parent=5 // pred_check
        %p579 = pneg %p578
      $region78: #{tpu_custom_call.1} parent=5 // pred_check_branch
        %581 = sbr.rel (%p579) target = $region80
      $region79: #{tpu_custom_call.1} parent=5 // pred_region
        // Predicated region
        $region81: #{tpu_custom_call.1} parent=79 // pred_check
          %p582 = pneg %p73
        $region82: #{tpu_custom_call.1} parent=79 // pred_check_branch
          %584 = sbr.rel (%p582) target = $region84
        $region83: #{tpu_custom_call.1} parent=79 // pred_region
          %p585 = scmp.lt.s32.totalorder %s39, 1
          %s586 = scalar_select %p585, %s39, 1
          %p587 = scmp.lt.s32.totalorder %s40, 1
          %s588 = scalar_select %p587, %s40, 1
          %s589 = smul.addr %s586, 2
          %s590 = sadd.s32 %s588, %s589
          %s591 = smul.addr %s590, 8
          %s592 = scalar_lea.vmem %s0, %s591
        $region84: #{tpu_custom_call.1} parent=79 // pred_fallthru
          _
        // Predicated region
        $region85: #{tpu_custom_call.1} parent=79 // pred_check
          %p593 = pneg %p101
        $region86: #{tpu_custom_call.1} parent=79 // pred_check_branch
          %595 = sbr.rel (%p593) target = $region88
        $region87: #{tpu_custom_call.1} parent=79 // pred_region
          %s596 = sand.u32 %s91, 1
          %s597 = scalar_lea.sflag [#allocation7], %s596
          %s598 = sand.u32 %s91, 1
          %s599 = smul.addr %s598, 8
          %s600 = scalar_lea.vmem [#allocation6], %s599
          %602 = vsyncadd %s597, 0
          %s603 = smul.addr %s39, 2
          %s604 = sadd.s32 %s41, %s603
          %s605 = smul.addr %s604, 8
          %s606 = scalar_lea.hbm %s1, %s605
          %s608 = sshll.u32 %s606, 4
          %s609 = int_to_ptr.hbm [resolvable:$true] %s608
          %s610 = sshll.u32 %s600, 4
          %s611 = int_to_ptr.vmem [resolvable:$true] %s610
          %613 = dma.hbm_to_vmem [thread:$0]  %s609, 128, %s611, %s597
        $region88: #{tpu_custom_call.1} parent=79 // pred_fallthru
          _
      $region80: #{tpu_custom_call.1} parent=5 // pred_fallthru
        _
      %p614 = scmp.le.s32.totalorder 1, %s32
      %p615 = scmp.lt.s32.totalorder %s32, 9
      %p616 = pnand %p614, %p615
      %p617 = pneg %p616
      // Predicated region
      $region89: #{tpu_custom_call.1} parent=5 // pred_check
        _
      $region90: #{tpu_custom_call.1} parent=5 // pred_check_branch
        %619 = sbr.rel (%p616) target = $region92
      $region91: #{tpu_custom_call.1} parent=5 // pred_region
        %s620 = ssub.s32 %s32, 1
        %s621 = sand.u32 %s94, 1
        %s622 = scalar_lea.sflag [#allocation7], %s621
        %s623 = sand.u32 %s94, 1
        %s624 = smul.addr %s623, 8
        %s625 = scalar_lea.vmem [#allocation6], %s624
        // Predicated region
        $region93: #{tpu_custom_call.1} parent=91 // pred_check
          %p626 = pneg %p107
        $region94: #{tpu_custom_call.1} parent=91 // pred_check_branch
          %628 = sbr.rel (%p626) target = $region96
        $region95: #{tpu_custom_call.1} parent=91 // pred_region
          %630 = dma.done %s622, 128
        $region96: #{tpu_custom_call.1} parent=91 // pred_fallthru
          _
        // Predicated region
        $region97: #{tpu_custom_call.1} parent=91 // pred_check
          %p631 = pneg %p170
        $region98: #{tpu_custom_call.1} parent=91 // pred_check_branch
          %633 = sbr.rel (%p631) target = $region100
        $region99: #{tpu_custom_call.1} parent=91 // pred_region
          %635 = dma.done [#allocation10], 256
        $region100: #{tpu_custom_call.1} parent=91 // pred_fallthru
          _
        // Predicated region
        $region101: #{tpu_custom_call.1} parent=91 // pred_check
          %p636 = pneg %p212
        $region102: #{tpu_custom_call.1} parent=91 // pred_check_branch
          %638 = sbr.rel (%p636) target = $region104
        $region103: #{tpu_custom_call.1} parent=91 // pred_region
          %640 = dma.done [#allocation10], 256
        $region104: #{tpu_custom_call.1} parent=91 // pred_fallthru
          _
        // Predicated region
        $region105: #{tpu_custom_call.1} parent=91 // pred_check
          %p641 = pneg %p254
        $region106: #{tpu_custom_call.1} parent=91 // pred_check_branch
          %643 = sbr.rel (%p641) target = $region108
        $region107: #{tpu_custom_call.1} parent=91 // pred_region
          %645 = dma.done [#allocation13], 256
        $region108: #{tpu_custom_call.1} parent=91 // pred_fallthru
          _
        // Predicated region
        $region109: #{tpu_custom_call.1} parent=91 // pred_check
          %p646 = pneg %p338
        $region110: #{tpu_custom_call.1} parent=91 // pred_check_branch
          %648 = sbr.rel (%p646) target = $region112
        $region111: #{tpu_custom_call.1} parent=91 // pred_region
          %650 = dma.done [#allocation13], 256
        $region112: #{tpu_custom_call.1} parent=91 // pred_fallthru
          _
        %p651 = scmp.lt.s32.totalorder %s42, 1
        %s652 = scalar_select %p651, %s42, 1
        %p653 = scmp.lt.s32.totalorder %s43, 1
        %s654 = scalar_select %p653, %s43, 1
        %s655 = smul.addr %s652, 2
        %s656 = sadd.s32 %s654, %s655
        %s657 = smul.addr %s656, 8
        %s658 = scalar_lea.vmem %s0, %s657
        %p659 = pneg %p79
        %p660 = pneg %p76
        %s661 = sand.u32 %s94, 1
        %s662 = scalar_lea.sflag [#allocation7], %s661
        %s663 = sand.u32 %s94, 1
        %s664 = smul.addr %s663, 8
        %s665 = scalar_lea.vmem [#allocation6], %s664
        %p666 = pneg %p107
        %p667 = pneg %p104
        %p668 = pneg %p128
        %p669 = pneg %p125
        %p670 = pneg %p149
        %p671 = pneg %p146
        %p672 = pneg %p170
        %p673 = pneg %p167
        %p674 = pneg %p191
        %p675 = pneg %p188
        %p676 = pneg %p212
        %p677 = pneg %p209
        %p678 = pneg %p233
        %p679 = pneg %p230
        %p680 = pneg %p254
        %p681 = pneg %p251
        %p682 = pneg %p275
        %p683 = pneg %p272
        %p684 = pneg %p296
        %p685 = pneg %p293
        %p686 = pneg %p317
        %p687 = pneg %p314
        %p688 = pneg %p338
        %p689 = pneg %p335
        %p690 = pneg %p359
        %p691 = pneg %p356
        %p692 = pneg %p380
        %p693 = pneg %p377
        %p694 = pneg %p401
        %p695 = pneg %p398
        %p696 = pneg %p422
        %p697 = pneg %p419
        %p698 = pneg %p443
        %p699 = pneg %p440
        %p700 = pneg %p471
        %p701 = pneg %p468
        %s702 = sand.u32 %s458, 1
        %s703 = scalar_lea.sflag [#allocation8], %s702
        %s704 = sand.u32 %s458, 1
        %s705 = smul.addr %s704, 8
        %s706 = scalar_lea.vmem [#allocation15], %s705
        %p707 = scmp.lt.s32.totalorder %s42, 1
        %s708 = scalar_select %p707, %s42, 1
        %p709 = scmp.lt.s32.totalorder %s43, 1
        %s710 = scalar_select %p709, %s43, 1
        %s711 = smul.addr %s708, 2
        %s712 = sadd.s32 %s710, %s711
        %s713 = smul.addr %s712, 8
        %s714 = scalar_lea.vmem %s0, %s713
        %v716 = vld [vmem:[%s714] sm:$0xff]
        %p717 = scmp.eq.s32.totalorder %s44, 0
        // Predicated region
        $region113: #{tpu_custom_call.1} parent=91 // pred_check
          %p718 = pneg %p717
        $region114: #{tpu_custom_call.1} parent=91 // pred_check_branch
          %720 = sbr.rel (%p718) target = $region116
        $region115: #{tpu_custom_call.1} parent=91 // pred_region
          %v721 = vpack.c.bf16 %v716, %v716
          %v722 = vld [vmem:[%s2] sm:$0xf]
          %v723 = vld [vmem:[%s2 + $0x4] sm:$0xf]
          %v724 = vld [vmem:[%s2 + $0x8] sm:$0xf]
          %v725 = vld [vmem:[%s2 + $0xc] sm:$0xf]
          %v726 = vld [vmem:[%s3] sm:$0x1]
          %v728 = vperm.slane %v726, 0
          %v734 = vunpack.c.l.b16 %v722
          %v735 = vunpack.c.l.b16 %v723
          %v736 = vunpack.c.l.b16 %v724
          %v737 = vunpack.c.l.b16 %v725
          %v738 = vpack.c.b16 %v735, %v734
          %v739 = vpack.c.b16 %v737, %v736
          %vm742 = vcmask 261120
          %v744 = vsel %vm742, %v721, 0
          %746 = vmatpush.bf16.msra.mxu0 0
          %747 = vmatpush.bf16.msra.mxu0 0
          %748 = vmatpush.bf16.msra.mxu0 0
          %749 = vmatpush.bf16.msra.mxu0 0
          %750 = vmatpush.bf16.msra.mxu0 0
          %751 = vmatpush.bf16.msra.mxu0 0
          %752 = vmatpush.bf16.msra.mxu0 %v739
          %753 = vmatpush.bf16.msra.mxu0 %v738
          %754 = vmatmul.bf16.gmra.mxu0 %v744
          %v755 = vpop.f32.mrf.mxu0
          %v756 = vadd.f32 %v728, %v755
          %v757 = vpop.f32.mrf.mxu0
          %758 = vdwg.mxu0
          %v759 = vmul.f32 %v756, 0.35355338
          %v760 = vpack.c.bf16 %v759, %v759
          %vm761 = vcmask 257024
          %762 = vst.msk [vmem:[#allocation2] sm:$0xf] %vm761, %v760
          %vm763 = vcmask 7168
          %764 = vst.msk [vmem:[#allocation3] sm:$0xff] %vm763, -inf
          %765 = vst.msk [vmem:[#allocation3 + $0x8] sm:$0xff] %vm763, -inf
          %766 = vst.msk [vmem:[#allocation3 + $0x10] sm:$0xff] %vm763, -inf
          %767 = vst.msk [vmem:[#allocation3 + $0x18] sm:$0xff] %vm763, -inf
          %768 = vst.msk [vmem:[#allocation4] sm:$0xff] %vm763, 0.0
          %769 = vst.msk [vmem:[#allocation4 + $0x8] sm:$0xff] %vm763, 0.0
          %770 = vst.msk [vmem:[#allocation4 + $0x10] sm:$0xff] %vm763, 0.0
          %771 = vst.msk [vmem:[#allocation4 + $0x18] sm:$0xff] %vm763, 0.0
          %vm772 = vcmask 64512
          %773 = vst.msk [vmem:[#allocation5] sm:$0xff] %vm772, 0.0
          %774 = vst.msk [vmem:[#allocation5 + $0x8] sm:$0xff] %vm772, 0.0
          %775 = vst.msk [vmem:[#allocation5 + $0x10] sm:$0xff] %vm772, 0.0
          %776 = vst.msk [vmem:[#allocation5 + $0x18] sm:$0xff] %vm772, 0.0
        $region116: #{tpu_custom_call.1} parent=91 // pred_fallthru
          _
        %v777 = vld [vmem:[%s625] sm:$0xff]
        %v778 = vpack.c.bf16 %v777, %v777
        %v779 = vld [vmem:[#allocation9] sm:$0xf]
        %v780 = vld [vmem:[#allocation9 + $0x4] sm:$0xf]
        %v781 = vld [vmem:[#allocation9 + $0x8] sm:$0xf]
        %v782 = vld [vmem:[#allocation9 + $0xc] sm:$0xf]
        %v783 = vld [vmem:[%s5] sm:$0x1]
        %v785 = vperm.slane %v783, 0
        %v791 = vunpack.c.l.b16 %v779
        %v792 = vunpack.c.l.b16 %v780
        %v793 = vunpack.c.l.b16 %v781
        %v794 = vunpack.c.l.b16 %v782
        %v795 = vpack.c.b16 %v792, %v791
        %v796 = vpack.c.b16 %v794, %v793
        %vm799 = vcmask 261120
        %v801 = vsel %vm799, %v778, 0
        %803 = vmatpush.bf16.msra.mxu0 0
        %804 = vmatpush.bf16.msra.mxu0 0
        %805 = vmatpush.bf16.msra.mxu0 0
        %806 = vmatpush.bf16.msra.mxu0 0
        %807 = vmatpush.bf16.msra.mxu0 0
        %808 = vmatpush.bf16.msra.mxu0 0
        %809 = vmatpush.bf16.msra.mxu0 %v796
        %810 = vmatpush.bf16.msra.mxu0 %v795
        %811 = vmatmul.bf16.gmra.mxu0 %v801
        %v812 = vpop.f32.mrf.mxu0
        %v813 = vadd.f32 %v785, %v812
        %v814 = vpop.f32.mrf.mxu0
        %815 = vdwg.mxu0
        %v816 = vpack.c.bf16 %v813, %v813
        %v817 = vld [vmem:[#allocation11] sm:$0xf]
        %v818 = vld [vmem:[#allocation11 + $0x4] sm:$0xf]
        %v819 = vld [vmem:[#allocation11 + $0x8] sm:$0xf]
        %v820 = vld [vmem:[#allocation11 + $0xc] sm:$0xf]
        %v821 = vld [vmem:[%s7] sm:$0x1]
        %v823 = vperm.slane %v821, 0
        %v829 = vunpack.c.l.b16 %v817
        %v830 = vunpack.c.l.b16 %v818
        %v831 = vunpack.c.l.b16 %v819
        %v832 = vunpack.c.l.b16 %v820
        %v833 = vpack.c.b16 %v830, %v829
        %v834 = vpack.c.b16 %v832, %v831
        %837 = vmatpush.bf16.msra.mxu0 0
        %838 = vmatpush.bf16.msra.mxu0 0
        %839 = vmatpush.bf16.msra.mxu0 0
        %840 = vmatpush.bf16.msra.mxu0 0
        %841 = vmatpush.bf16.msra.mxu0 0
        %842 = vmatpush.bf16.msra.mxu0 0
        %843 = vmatpush.bf16.msra.mxu0 %v834
        %844 = vmatpush.bf16.msra.mxu0 %v833
        %845 = vmatmul.bf16.gmra.mxu0 %v801
        %v846 = vpop.f32.mrf.mxu0
        %v847 = vadd.f32 %v823, %v846
        %v848 = vpop.f32.mrf.mxu0
        %849 = vdwg.mxu0
        %v850 = vpack.c.bf16 %v847, %v847
        %v851 = vld [vmem:[#allocation2] sm:$0xf]
        %vm852 = vcmask 64512
        %v854 = vsel %vm852, %v851, 0
        %v857 = vsel %vm852, %v816, 0
        %859 = vmatpush.bf16.xpose.msra.mxu0 0
        %860 = vmatpush.bf16.xpose.msra.mxu0 0
        %861 = vmatpush.bf16.xpose.msra.mxu0 0
        %862 = vmatpush.bf16.xpose.msra.mxu0 0
        %863 = vmatpush.bf16.xpose.msra.mxu0 0
        %864 = vmatpush.bf16.xpose.msra.mxu0 0
        %865 = vmatpush.bf16.xpose.msra.mxu0 0
        %866 = vmatpush.bf16.xpose.msra.mxu0 %v857
        %867 = vmatmul.bf16.gmra.mxu0 %v854
        %v868 = vpop.f32.mrf.mxu0
        %v869 = vadd.f32 0.0, %v868
        %v870 = vpop.f32.mrf.mxu0
        %871 = vdwg.mxu0
        %v872 = vld [vmem:[#allocation3] sm:$0xff]
        %v873 = vsel %vm852, %v869, -inf
        %874 = vmax.xlane.f32.xlu0 %v873
        %v875 = vpop.xlane.xlu0 %874
        %v876 = vmax.f32 %v872, %v875
        %v877 = vsub.f32 %v872, %v876
        %v878 = vmul.f32 %v877, 1.442695
        %v879 = vpow.pop %v878
        %881 = vset.pattern.permute.xlu0 0
        %882 = vperm.xlu0 %881, %v876
        %v883 = vpop.permute.xlu0 %882
        %v885 = vsub.f32 %v869, %v883
        %v886 = vmul.f32 %v885, 1.442695
        %v887 = vpow.pop %v886
        %v888 = vld [vmem:[#allocation4] sm:$0xff]
        %v889 = vmul.f32 %v879, %v888
        %v890 = vsel %vm852, %v887, 0.0
        %891 = vadd.xlane.f32.xlu0 %v890
        %v892 = vpop.xlane.xlu0 %891
        %v893 = vadd.f32 %v889, %v892
        %vm894 = vcmask 7168
        %895 = vst.msk [vmem:[#allocation4] sm:$0xff] %vm894, %v893
        %v896 = vld [vmem:[#allocation5] sm:$0xff]
        %898 = vset.pattern.permute.xlu0 0
        %899 = vperm.xlu0 %898, %v879
        %v900 = vpop.permute.xlu0 %899
        %v902 = vmul.f32 %v900, %v896
        %v903 = vpack.c.bf16 %v887, %v887
        %v905 = vsel %vm852, %v903, 0
        %vm907 = vcmask 1043456
        %v909 = vsel %vm907, %v850, 0
        %911 = vmatpush.bf16.msra.mxu0 0
        %912 = vmatpush.bf16.msra.mxu0 0
        %913 = vmatpush.bf16.msra.mxu0 0
        %914 = vmatpush.bf16.msra.mxu0 0
        %915 = vmatpush.bf16.msra.mxu0 0
        %916 = vmatpush.bf16.msra.mxu0 0
        %917 = vmatpush.bf16.msra.mxu0 0
        %918 = vmatpush.bf16.msra.mxu0 %v909
        %919 = vmatmul.bf16.gmra.mxu0 %v905
        %v920 = vpop.f32.mrf.mxu0
        %v921 = vadd.f32 0.0, %v920
        %v922 = vpop.f32.mrf.mxu0
        %923 = vdwg.mxu0
        %v924 = vadd.f32 %v902, %v921
        %925 = vst.msk [vmem:[#allocation5] sm:$0xff] %vm852, %v924
        %926 = vst.msk [vmem:[#allocation3] sm:$0xff] %vm894, %v876
        %v928 = vunpack.c.l.b16 %v851
        %v929 = vpack.c.b16 %v928, %v928
        %930 = vrot.lane.b32.xlu0 %v929, 120
        %v931 = vpop.permute.xlu0 %930
        %v933 = vunpack.c.l.b16 %v816
        %v934 = vpack.c.b16 %v933, %v933
        %935 = vrot.lane.b32.xlu0 %v934, 120
        %v936 = vpop.permute.xlu0 %935
        %v938 = vsel %vm852, %v931, 0
        %v941 = vsel %vm852, %v936, 0
        %943 = vmatpush.bf16.xpose.msra.mxu0 0
        %944 = vmatpush.bf16.xpose.msra.mxu0 0
        %945 = vmatpush.bf16.xpose.msra.mxu0 0
        %946 = vmatpush.bf16.xpose.msra.mxu0 0
        %947 = vmatpush.bf16.xpose.msra.mxu0 0
        %948 = vmatpush.bf16.xpose.msra.mxu0 0
        %949 = vmatpush.bf16.xpose.msra.mxu0 0
        %950 = vmatpush.bf16.xpose.msra.mxu0 %v941
        %951 = vmatmul.bf16.gmra.mxu0 %v938
        %v952 = vpop.f32.mrf.mxu0
        %v953 = vadd.f32 0.0, %v952
        %v954 = vpop.f32.mrf.mxu0
        %955 = vdwg.mxu0
        %s956 = scalar_lea.vmem [#allocation3], 8
        %v957 = vld [vmem:[%s956] sm:$0xff]
        %v958 = vsel %vm852, %v953, -inf
        %959 = vmax.xlane.f32.xlu0 %v958
        %v960 = vpop.xlane.xlu0 %959
        %v961 = vmax.f32 %v957, %v960
        %v962 = vsub.f32 %v957, %v961
        %v963 = vmul.f32 %v962, 1.442695
        %v964 = vpow.pop %v963
        %966 = vset.pattern.permute.xlu0 0
        %967 = vperm.xlu0 %966, %v961
        %v968 = vpop.permute.xlu0 %967
        %v970 = vsub.f32 %v953, %v968
        %v971 = vmul.f32 %v970, 1.442695
        %v972 = vpow.pop %v971
        %s973 = scalar_lea.vmem [#allocation4], 8
        %v974 = vld [vmem:[%s973] sm:$0xff]
        %v975 = vmul.f32 %v964, %v974
        %v976 = vsel %vm852, %v972, 0.0
        %977 = vadd.xlane.f32.xlu0 %v976
        %v978 = vpop.xlane.xlu0 %977
        %v979 = vadd.f32 %v975, %v978
        %980 = vst.msk [vmem:[%s973] sm:$0xff] %vm894, %v979
        %s981 = scalar_lea.vmem [#allocation5], 8
        %v982 = vld [vmem:[%s981] sm:$0xff]
        %984 = vset.pattern.permute.xlu0 0
        %985 = vperm.xlu0 %984, %v964
        %v986 = vpop.permute.xlu0 %985
        %v988 = vmul.f32 %v986, %v982
        %v989 = vpack.c.bf16 %v972, %v972
        %v991 = vunpack.c.l.b16 %v850
        %v992 = vpack.c.b16 %v991, %v991
        %993 = vrot.lane.b32.xlu0 %v992, 120
        %v994 = vpop.permute.xlu0 %993
        %v996 = vsel %vm852, %v989, 0
        %v999 = vsel %vm907, %v994, 0
        %1001 = vmatpush.bf16.msra.mxu0 0
        %1002 = vmatpush.bf16.msra.mxu0 0
        %1003 = vmatpush.bf16.msra.mxu0 0
        %1004 = vmatpush.bf16.msra.mxu0 0
        %1005 = vmatpush.bf16.msra.mxu0 0
        %1006 = vmatpush.bf16.msra.mxu0 0
        %1007 = vmatpush.bf16.msra.mxu0 0
        %1008 = vmatpush.bf16.msra.mxu0 %v999
        %1009 = vmatmul.bf16.gmra.mxu0 %v996
        %v1010 = vpop.f32.mrf.mxu0
        %v1011 = vadd.f32 0.0, %v1010
        %v1012 = vpop.f32.mrf.mxu0
        %1013 = vdwg.mxu0
        %v1014 = vadd.f32 %v988, %v1011
        %1015 = vst.msk [vmem:[%s981] sm:$0xff] %vm852, %v1014
        %1016 = vst.msk [vmem:[%s956] sm:$0xff] %vm894, %v961
        %1017 = vrot.lane.b32.xlu0 %v929, 112
        %v1018 = vpop.permute.xlu0 %1017
        %1019 = vrot.lane.b32.xlu0 %v934, 112
        %v1020 = vpop.permute.xlu0 %1019
        %v1022 = vsel %vm852, %v1018, 0
        %v1025 = vsel %vm852, %v1020, 0
        %1027 = vmatpush.bf16.xpose.msra.mxu0 0
        %1028 = vmatpush.bf16.xpose.msra.mxu0 0
        %1029 = vmatpush.bf16.xpose.msra.mxu0 0
        %1030 = vmatpush.bf16.xpose.msra.mxu0 0
        %1031 = vmatpush.bf16.xpose.msra.mxu0 0
        %1032 = vmatpush.bf16.xpose.msra.mxu0 0
        %1033 = vmatpush.bf16.xpose.msra.mxu0 0
        %1034 = vmatpush.bf16.xpose.msra.mxu0 %v1025
        %1035 = vmatmul.bf16.gmra.mxu0 %v1022
        %v1036 = vpop.f32.mrf.mxu0
        %v1037 = vadd.f32 0.0, %v1036
        %v1038 = vpop.f32.mrf.mxu0
        %1039 = vdwg.mxu0
        %s1040 = scalar_lea.vmem [#allocation3], 16
        %v1041 = vld [vmem:[%s1040] sm:$0xff]
        %v1042 = vsel %vm852, %v1037, -inf
        %1043 = vmax.xlane.f32.xlu0 %v1042
        %v1044 = vpop.xlane.xlu0 %1043
        %v1045 = vmax.f32 %v1041, %v1044
        %v1046 = vsub.f32 %v1041, %v1045
        %v1047 = vmul.f32 %v1046, 1.442695
        %v1048 = vpow.pop %v1047
        %1050 = vset.pattern.permute.xlu0 0
        %1051 = vperm.xlu0 %1050, %v1045
        %v1052 = vpop.permute.xlu0 %1051
        %v1054 = vsub.f32 %v1037, %v1052
        %v1055 = vmul.f32 %v1054, 1.442695
        %v1056 = vpow.pop %v1055
        %s1057 = scalar_lea.vmem [#allocation4], 16
        %v1058 = vld [vmem:[%s1057] sm:$0xff]
        %v1059 = vmul.f32 %v1048, %v1058
        %v1060 = vsel %vm852, %v1056, 0.0
        %1061 = vadd.xlane.f32.xlu0 %v1060
        %v1062 = vpop.xlane.xlu0 %1061
        %v1063 = vadd.f32 %v1059, %v1062
        %1064 = vst.msk [vmem:[%s1057] sm:$0xff] %vm894, %v1063
        %s1065 = scalar_lea.vmem [#allocation5], 16
        %v1066 = vld [vmem:[%s1065] sm:$0xff]
        %1068 = vset.pattern.permute.xlu0 0
        %1069 = vperm.xlu0 %1068, %v1048
        %v1070 = vpop.permute.xlu0 %1069
        %v1072 = vmul.f32 %v1070, %v1066
        %v1073 = vpack.c.bf16 %v1056, %v1056
        %1074 = vrot.lane.b32.xlu0 %v992, 112
        %v1075 = vpop.permute.xlu0 %1074
        %v1077 = vsel %vm852, %v1073, 0
        %v1080 = vsel %vm907, %v1075, 0
        %1082 = vmatpush.bf16.msra.mxu0 0
        %1083 = vmatpush.bf16.msra.mxu0 0
        %1084 = vmatpush.bf16.msra.mxu0 0
        %1085 = vmatpush.bf16.msra.mxu0 0
        %1086 = vmatpush.bf16.msra.mxu0 0
        %1087 = vmatpush.bf16.msra.mxu0 0
        %1088 = vmatpush.bf16.msra.mxu0 0
        %1089 = vmatpush.bf16.msra.mxu0 %v1080
        %1090 = vmatmul.bf16.gmra.mxu0 %v1077
        %v1091 = vpop.f32.mrf.mxu0
        %v1092 = vadd.f32 0.0, %v1091
        %v1093 = vpop.f32.mrf.mxu0
        %1094 = vdwg.mxu0
        %v1095 = vadd.f32 %v1072, %v1092
        %1096 = vst.msk [vmem:[%s1065] sm:$0xff] %vm852, %v1095
        %1097 = vst.msk [vmem:[%s1040] sm:$0xff] %vm894, %v1045
        %1098 = vrot.lane.b32.xlu0 %v929, 104
        %v1099 = vpop.permute.xlu0 %1098
        %1100 = vrot.lane.b32.xlu0 %v934, 104
        %v1101 = vpop.permute.xlu0 %1100
        %v1103 = vsel %vm852, %v1099, 0
        %v1106 = vsel %vm852, %v1101, 0
        %1108 = vmatpush.bf16.xpose.msra.mxu0 0
        %1109 = vmatpush.bf16.xpose.msra.mxu0 0
        %1110 = vmatpush.bf16.xpose.msra.mxu0 0
        %1111 = vmatpush.bf16.xpose.msra.mxu0 0
        %1112 = vmatpush.bf16.xpose.msra.mxu0 0
        %1113 = vmatpush.bf16.xpose.msra.mxu0 0
        %1114 = vmatpush.bf16.xpose.msra.mxu0 0
        %1115 = vmatpush.bf16.xpose.msra.mxu0 %v1106
        %1116 = vmatmul.bf16.gmra.mxu0 %v1103
        %v1117 = vpop.f32.mrf.mxu0
        %v1118 = vadd.f32 0.0, %v1117
        %v1119 = vpop.f32.mrf.mxu0
        %1120 = vdwg.mxu0
        %s1121 = scalar_lea.vmem [#allocation3], 24
        %v1122 = vld [vmem:[%s1121] sm:$0xff]
        %v1123 = vsel %vm852, %v1118, -inf
        %1124 = vmax.xlane.f32.xlu0 %v1123
        %v1125 = vpop.xlane.xlu0 %1124
        %v1126 = vmax.f32 %v1122, %v1125
        %v1127 = vsub.f32 %v1122, %v1126
        %v1128 = vmul.f32 %v1127, 1.442695
        %v1129 = vpow.pop %v1128
        %1131 = vset.pattern.permute.xlu0 0
        %1132 = vperm.xlu0 %1131, %v1126
        %v1133 = vpop.permute.xlu0 %1132
        %v1135 = vsub.f32 %v1118, %v1133
        %v1136 = vmul.f32 %v1135, 1.442695
        %v1137 = vpow.pop %v1136
        %s1138 = scalar_lea.vmem [#allocation4], 24
        %v1139 = vld [vmem:[%s1138] sm:$0xff]
        %v1140 = vmul.f32 %v1129, %v1139
        %v1141 = vsel %vm852, %v1137, 0.0
        %1142 = vadd.xlane.f32.xlu0 %v1141
        %v1143 = vpop.xlane.xlu0 %1142
        %v1144 = vadd.f32 %v1140, %v1143
        %1145 = vst.msk [vmem:[%s1138] sm:$0xff] %vm894, %v1144
        %s1146 = scalar_lea.vmem [#allocation5], 24
        %v1147 = vld [vmem:[%s1146] sm:$0xff]
        %1149 = vset.pattern.permute.xlu0 0
        %1150 = vperm.xlu0 %1149, %v1129
        %v1151 = vpop.permute.xlu0 %1150
        %v1153 = vmul.f32 %v1151, %v1147
        %v1154 = vpack.c.bf16 %v1137, %v1137
        %1155 = vrot.lane.b32.xlu0 %v992, 104
        %v1156 = vpop.permute.xlu0 %1155
        %v1158 = vsel %vm852, %v1154, 0
        %v1161 = vsel %vm907, %v1156, 0
        %1163 = vmatpush.bf16.msra.mxu0 0
        %1164 = vmatpush.bf16.msra.mxu0 0
        %1165 = vmatpush.bf16.msra.mxu0 0
        %1166 = vmatpush.bf16.msra.mxu0 0
        %1167 = vmatpush.bf16.msra.mxu0 0
        %1168 = vmatpush.bf16.msra.mxu0 0
        %1169 = vmatpush.bf16.msra.mxu0 0
        %1170 = vmatpush.bf16.msra.mxu0 %v1161
        %1171 = vmatmul.bf16.gmra.mxu0 %v1158
        %v1172 = vpop.f32.mrf.mxu0
        %v1173 = vadd.f32 0.0, %v1172
        %v1174 = vpop.f32.mrf.mxu0
        %1175 = vdwg.mxu0
        %v1176 = vadd.f32 %v1153, %v1173
        %1177 = vst.msk [vmem:[%s1146] sm:$0xff] %vm852, %v1176
        %1178 = vst.msk [vmem:[%s1121] sm:$0xff] %vm894, %v1126
        %p1179 = scmp.eq.s32.totalorder %s44, 1
        // Predicated region
        $region117: #{tpu_custom_call.1} parent=91 // pred_check
          %p1180 = pneg %p1179
        $region118: #{tpu_custom_call.1} parent=91 // pred_check_branch
          %1182 = sbr.rel (%p1180) target = $region120
        $region119: #{tpu_custom_call.1} parent=91 // pred_region
          %v1183 = vld [vmem:[#allocation4] sm:$0xff]
          %v1184 = vrcp.pop %v1183
          %v1185 = vld [vmem:[#allocation5] sm:$0xff]
          %1187 = vset.pattern.permute.xlu0 0
          %1188 = vperm.xlu0 %1187, %v1184
          %v1189 = vpop.permute.xlu0 %1188
          %v1191 = vmul.f32 %v1185, %v1189
          %v1192 = vpack.c.bf16 %v1191, %v1191
          %v1193 = vld [vmem:[#allocation12] sm:$0xf]
          %v1194 = vld [vmem:[%s973] sm:$0xff]
          %v1195 = vrcp.pop %v1194
          %v1196 = vld [vmem:[%s981] sm:$0xff]
          %1198 = vset.pattern.permute.xlu0 0
          %1199 = vperm.xlu0 %1198, %v1195
          %v1200 = vpop.permute.xlu0 %1199
          %v1202 = vmul.f32 %v1196, %v1200
          %v1203 = vpack.c.bf16 %v1202, %v1202
          %v1204 = vld [vmem:[#allocation12 + $0x4] sm:$0xf]
          %v1206 = vsel %vm852, %v1203, 0
          %v1209 = vsel %vm907, %v1204, 0
          %1211 = vmatpush.bf16.msra.mxu0 0
          %1212 = vmatpush.bf16.msra.mxu0 0
          %1213 = vmatpush.bf16.msra.mxu0 0
          %1214 = vmatpush.bf16.msra.mxu0 0
          %1215 = vmatpush.bf16.msra.mxu0 0
          %1216 = vmatpush.bf16.msra.mxu0 0
          %1217 = vmatpush.bf16.msra.mxu0 0
          %1218 = vmatpush.bf16.msra.mxu0 %v1209
          %1219 = vmatmul.bf16.gmra.mxu0 %v1206
          %v1220 = vpop.f32.mrf.mxu0
          %v1221 = vadd.f32 0.0, %v1220
          %v1222 = vpop.f32.mrf.mxu0
          %1223 = vdwg.mxu0
          %v1225 = vsel %vm852, %v1192, 0
          %v1228 = vsel %vm907, %v1193, 0
          %1230 = vmatpush.bf16.msra.mxu0 0
          %1231 = vmatpush.bf16.msra.mxu0 0
          %1232 = vmatpush.bf16.msra.mxu0 0
          %1233 = vmatpush.bf16.msra.mxu0 0
          %1234 = vmatpush.bf16.msra.mxu0 0
          %1235 = vmatpush.bf16.msra.mxu0 0
          %1236 = vmatpush.bf16.msra.mxu0 0
          %1237 = vmatpush.bf16.msra.mxu0 %v1228
          %1238 = vmatmul.bf16.gmra.mxu0 %v1225
          %v1239 = vpop.f32.mrf.mxu0
          %v1240 = vadd.f32 %v1221, %v1239
          %v1241 = vpop.f32.mrf.mxu0
          %1242 = vdwg.mxu0
          %v1243 = vld [vmem:[%s1057] sm:$0xff]
          %v1244 = vrcp.pop %v1243
          %v1245 = vld [vmem:[%s1065] sm:$0xff]
          %1247 = vset.pattern.permute.xlu0 0
          %1248 = vperm.xlu0 %1247, %v1244
          %v1249 = vpop.permute.xlu0 %1248
          %v1251 = vmul.f32 %v1245, %v1249
          %v1252 = vpack.c.bf16 %v1251, %v1251
          %v1253 = vld [vmem:[#allocation12 + $0x8] sm:$0xf]
          %v1255 = vsel %vm852, %v1252, 0
          %v1258 = vsel %vm907, %v1253, 0
          %1260 = vmatpush.bf16.msra.mxu0 0
          %1261 = vmatpush.bf16.msra.mxu0 0
          %1262 = vmatpush.bf16.msra.mxu0 0
          %1263 = vmatpush.bf16.msra.mxu0 0
          %1264 = vmatpush.bf16.msra.mxu0 0
          %1265 = vmatpush.bf16.msra.mxu0 0
          %1266 = vmatpush.bf16.msra.mxu0 0
          %1267 = vmatpush.bf16.msra.mxu0 %v1258
          %1268 = vmatmul.bf16.gmra.mxu0 %v1255
          %v1269 = vpop.f32.mrf.mxu0
          %v1270 = vadd.f32 0.0, %v1269
          %v1271 = vpop.f32.mrf.mxu0
          %1272 = vdwg.mxu0
          %v1273 = vadd.f32 %v1240, %v1270
          %v1274 = vld [vmem:[%s1138] sm:$0xff]
          %v1275 = vrcp.pop %v1274
          %v1276 = vld [vmem:[%s1146] sm:$0xff]
          %1278 = vset.pattern.permute.xlu0 0
          %1279 = vperm.xlu0 %1278, %v1275
          %v1280 = vpop.permute.xlu0 %1279
          %v1282 = vmul.f32 %v1276, %v1280
          %v1283 = vpack.c.bf16 %v1282, %v1282
          %v1284 = vld [vmem:[#allocation12 + $0xc] sm:$0xf]
          %v1286 = vsel %vm852, %v1283, 0
          %v1289 = vsel %vm907, %v1284, 0
          %1291 = vmatpush.bf16.msra.mxu0 0
          %1292 = vmatpush.bf16.msra.mxu0 0
          %1293 = vmatpush.bf16.msra.mxu0 0
          %1294 = vmatpush.bf16.msra.mxu0 0
          %1295 = vmatpush.bf16.msra.mxu0 0
          %1296 = vmatpush.bf16.msra.mxu0 0
          %1297 = vmatpush.bf16.msra.mxu0 0
          %1298 = vmatpush.bf16.msra.mxu0 %v1289
          %1299 = vmatmul.bf16.gmra.mxu0 %v1286
          %v1300 = vpop.f32.mrf.mxu0
          %v1301 = vadd.f32 0.0, %v1300
          %v1302 = vpop.f32.mrf.mxu0
          %1303 = vdwg.mxu0
          %v1304 = vadd.f32 %v1273, %v1301
          %v1305 = vld [vmem:[%s9] sm:$0x1]
          %v1307 = vperm.slane %v1305, 0
          %v1309 = vadd.f32 %v1304, %v1307
          %v1310 = vadd.f32 %v716, %v1309
          %v1311 = vsel %vm799, %v1310, 0.0
          %1312 = vadd.xlane.f32.xlu0 %v1311
          %v1313 = vpop.xlane.xlu0 %1312
          %v1314 = vrcp.pop 32.0
          %v1315 = vmul.f32 32.0, %v1314
          %v1316 = vsub.f32 1.0, %v1315
          %v1317 = vmul.f32 %v1314, %v1316
          %v1318 = vadd.f32 %v1314, %v1317
          %vm1319 = vweird.f32 %v1314
          %v1320 = vsel %vm1319, %v1314, %v1318
          %v1321 = vmul.f32 %v1313, %v1320
          %v1322 = vsub.f32 %v1310, %v1321
          %v1323 = vmul.f32 %v1322, %v1322
          %v1324 = vsel %vm799, %v1323, 0.0
          %1325 = vadd.xlane.f32.xlu0 %v1324
          %v1326 = vpop.xlane.xlu0 %1325
          %v1327 = vmul.f32 %v1326, %v1320
          %v1328 = vadd.f32 %v1327, 1e-05
          %v1329 = vrsqrt.pop %v1328
          %v1330 = vmul.f32 %v1329, %v1328
          %v1331 = vmul.f32 %v1330, %v1329
          %v1332 = vmul.f32 0.5, %v1331
          %v1333 = vsub.f32 1.5, %v1332
          %v1334 = vmul.f32 %v1329, %v1333
          %vm1335 = vweird.f32 %v1328
          %vm1336 = vweird.f32 %v1329
          %vm1337 = vmor %vm1335, %vm1336
          %v1338 = vsel %vm1337, %v1329, %v1334
          %v1339 = vmul.f32 %v1322, %v1338
          %v1340 = vld [vmem:[%s10] sm:$0x1]
          %v1342 = vperm.slane %v1340, 0
          %v1344 = vmul.f32 %v1339, %v1342
          %v1345 = vld [vmem:[%s11] sm:$0x1]
          %v1347 = vperm.slane %v1345, 0
          %v1349 = vadd.f32 %v1344, %v1347
          %v1350 = vpack.c.bf16 %v1349, %v1349
          %v1351 = vld [vmem:[#allocation14] sm:$0xf]
          %v1352 = vld [vmem:[#allocation14 + $0x4] sm:$0xf]
          %v1353 = vld [vmem:[#allocation14 + $0x8] sm:$0xf]
          %v1354 = vld [vmem:[#allocation14 + $0xc] sm:$0xf]
          %v1355 = vld [vmem:[%s13] sm:$0x1]
          %v1357 = vperm.slane %v1355, 0
          %v1363 = vunpack.c.l.b16 %v1351
          %v1364 = vunpack.c.l.b16 %v1352
          %v1365 = vunpack.c.l.b16 %v1353
          %v1366 = vunpack.c.l.b16 %v1354
          %v1367 = vpack.c.b16 %v1364, %v1363
          %v1368 = vpack.c.b16 %v1366, %v1365
          %v1372 = vsel %vm799, %v1350, 0
          %1374 = vmatpush.bf16.msra.mxu0 0
          %1375 = vmatpush.bf16.msra.mxu0 0
          %1376 = vmatpush.bf16.msra.mxu0 0
          %1377 = vmatpush.bf16.msra.mxu0 0
          %1378 = vmatpush.bf16.msra.mxu0 0
          %1379 = vmatpush.bf16.msra.mxu0 0
          %1380 = vmatpush.bf16.msra.mxu0 %v1368
          %1381 = vmatpush.bf16.msra.mxu0 %v1367
          %1382 = vmatmul.bf16.gmra.mxu0 %v1372
          %v1383 = vpop.f32.mrf.mxu0
          %v1384 = vadd.f32 %v1357, %v1383
          %v1385 = vpop.f32.mrf.mxu0
          %1386 = vdwg.mxu0
          %v1387 = vmax.f32 %v1384, 0.0
          %v1388 = vpack.c.bf16 %v1387, %v1387
          %v1389 = vld [vmem:[%s14] sm:$0xf]
          %v1390 = vld [vmem:[%s14 + $0x4] sm:$0xf]
          %v1391 = vld [vmem:[%s14 + $0x8] sm:$0xf]
          %v1392 = vld [vmem:[%s14 + $0xc] sm:$0xf]
          %1393 = vrot.lane.b32.xlu0 %v1367, 96
          %v1394 = vpop.permute.xlu0 %1393
          %1395 = vrot.lane.b32.xlu0 %v1368, 96
          %v1396 = vpop.permute.xlu0 %1395
          %1399 = vrot.lane.b32.xlu0 %v1357, 96
          %v1400 = vpop.permute.xlu0 %1399
          %1402 = vmatpush.bf16.msra.mxu0 0
          %1403 = vmatpush.bf16.msra.mxu0 0
          %1404 = vmatpush.bf16.msra.mxu0 0
          %1405 = vmatpush.bf16.msra.mxu0 0
          %1406 = vmatpush.bf16.msra.mxu0 0
          %1407 = vmatpush.bf16.msra.mxu0 0
          %1408 = vmatpush.bf16.msra.mxu0 %v1396
          %1409 = vmatpush.bf16.msra.mxu0 %v1394
          %1410 = vmatmul.bf16.gmra.mxu0 %v1372
          %v1411 = vpop.f32.mrf.mxu0
          %v1412 = vadd.f32 %v1400, %v1411
          %v1413 = vpop.f32.mrf.mxu0
          %1414 = vdwg.mxu0
          %v1415 = vmax.f32 %v1412, 0.0
          %v1416 = vpack.c.bf16 %v1415, %v1415
          %v1417 = vld [vmem:[%s14 + $0x10] sm:$0xf]
          %v1418 = vld [vmem:[%s14 + $0x14] sm:$0xf]
          %v1419 = vld [vmem:[%s14 + $0x18] sm:$0xf]
          %v1420 = vld [vmem:[%s14 + $0x1c] sm:$0xf]
          %v1425 = vunpack.c.l.b16 %v1417
          %v1426 = vunpack.c.l.b16 %v1418
          %v1427 = vunpack.c.l.b16 %v1419
          %v1428 = vunpack.c.l.b16 %v1420
          %v1429 = vpack.c.b16 %v1426, %v1425
          %v1430 = vpack.c.b16 %v1428, %v1427
          %v1434 = vsel %vm799, %v1416, 0
          %1436 = vmatpush.bf16.msra.mxu0 0
          %1437 = vmatpush.bf16.msra.mxu0 0
          %1438 = vmatpush.bf16.msra.mxu0 0
          %1439 = vmatpush.bf16.msra.mxu0 0
          %1440 = vmatpush.bf16.msra.mxu0 0
          %1441 = vmatpush.bf16.msra.mxu0 0
          %1442 = vmatpush.bf16.msra.mxu0 %v1430
          %1443 = vmatpush.bf16.msra.mxu0 %v1429
          %1444 = vmatmul.bf16.gmra.mxu0 %v1434
          %v1445 = vpop.f32.mrf.mxu0
          %v1446 = vadd.f32 0.0, %v1445
          %v1447 = vpop.f32.mrf.mxu0
          %1448 = vdwg.mxu0
          %v1453 = vunpack.c.l.b16 %v1389
          %v1454 = vunpack.c.l.b16 %v1390
          %v1455 = vunpack.c.l.b16 %v1391
          %v1456 = vunpack.c.l.b16 %v1392
          %v1457 = vpack.c.b16 %v1454, %v1453
          %v1458 = vpack.c.b16 %v1456, %v1455
          %v1462 = vsel %vm799, %v1388, 0
          %1464 = vmatpush.bf16.msra.mxu0 0
          %1465 = vmatpush.bf16.msra.mxu0 0
          %1466 = vmatpush.bf16.msra.mxu0 0
          %1467 = vmatpush.bf16.msra.mxu0 0
          %1468 = vmatpush.bf16.msra.mxu0 0
          %1469 = vmatpush.bf16.msra.mxu0 0
          %1470 = vmatpush.bf16.msra.mxu0 %v1458
          %1471 = vmatpush.bf16.msra.mxu0 %v1457
          %1472 = vmatmul.bf16.gmra.mxu0 %v1462
          %v1473 = vpop.f32.mrf.mxu0
          %v1474 = vadd.f32 %v1446, %v1473
          %v1475 = vpop.f32.mrf.mxu0
          %1476 = vdwg.mxu0
          %v1477 = vld [vmem:[%s15] sm:$0x1]
          %v1479 = vperm.slane %v1477, 0
          %v1481 = vadd.f32 %v1474, %v1479
          %v1482 = vadd.f32 %v1349, %v1481
          %v1483 = vsel %vm799, %v1482, 0.0
          %1484 = vadd.xlane.f32.xlu0 %v1483
          %v1485 = vpop.xlane.xlu0 %1484
          %v1486 = vmul.f32 %v1485, %v1320
          %v1487 = vsub.f32 %v1482, %v1486
          %v1488 = vmul.f32 %v1487, %v1487
          %v1489 = vsel %vm799, %v1488, 0.0
          %1490 = vadd.xlane.f32.xlu0 %v1489
          %v1491 = vpop.xlane.xlu0 %1490
          %v1492 = vmul.f32 %v1491, %v1320
          %v1493 = vadd.f32 %v1492, 1e-05
          %v1494 = vrsqrt.pop %v1493
          %v1495 = vmul.f32 %v1494, %v1493
          %v1496 = vmul.f32 %v1495, %v1494
          %v1497 = vmul.f32 0.5, %v1496
          %v1498 = vsub.f32 1.5, %v1497
          %v1499 = vmul.f32 %v1494, %v1498
          %vm1500 = vweird.f32 %v1493
          %vm1501 = vweird.f32 %v1494
          %vm1502 = vmor %vm1500, %vm1501
          %v1503 = vsel %vm1502, %v1494, %v1499
          %v1504 = vmul.f32 %v1487, %v1503
          %v1505 = vld [vmem:[%s16] sm:$0x1]
          %v1507 = vperm.slane %v1505, 0
          %v1509 = vmul.f32 %v1504, %v1507
          %v1510 = vld [vmem:[%s17] sm:$0x1]
          %v1512 = vperm.slane %v1510, 0
          %v1514 = vadd.f32 %v1509, %v1512
          %1515 = vst.msk [vmem:[%s706] sm:$0xff] %vm799, %v1514
        $region120: #{tpu_custom_call.1} parent=91 // pred_fallthru
          _
        %s1516 = sand.u32 %s458, 1
        %s1517 = scalar_lea.sflag [#allocation8], %s1516
        %s1518 = sand.u32 %s458, 1
        %s1519 = smul.addr %s1518, 8
        %s1520 = scalar_lea.vmem [#allocation15], %s1519
        // Predicated region
        $region121: #{tpu_custom_call.1} parent=91 // pred_check
          %p1521 = pneg %p468
        $region122: #{tpu_custom_call.1} parent=91 // pred_check_branch
          %1523 = sbr.rel (%p1521) target = $region124
        $region123: #{tpu_custom_call.1} parent=91 // pred_region
          %1525 = vsyncadd %s1517, 0
          %s1526 = smul.addr %s42, 2
          %s1527 = sadd.s32 %s43, %s1526
          %s1528 = smul.addr %s1527, 8
          %s1529 = scalar_lea.hbm %s18, %s1528
          %s1531 = sshll.u32 %s1520, 4
          %s1532 = int_to_ptr.vmem [resolvable:$true] %s1531
          %s1533 = sshll.u32 %s1529, 4
          %s1534 = int_to_ptr.hbm [resolvable:$true] %s1533
          %1536 = dma.vmem_to_hbm [thread:$0]  %s1532, 128, %s1534, %s1517
        $region124: #{tpu_custom_call.1} parent=91 // pred_fallthru
          _
      $region92: #{tpu_custom_call.1} parent=5 // pred_fallthru
        _
      %p1537 = scmp.le.s32.totalorder 2, %s32
      // Predicated region
      $region125: #{tpu_custom_call.1} parent=5 // pred_check
        %p1538 = pneg %p1537
      $region126: #{tpu_custom_call.1} parent=5 // pred_check_branch
        %1540 = sbr.rel (%p1538) target = $region128
      $region127: #{tpu_custom_call.1} parent=5 // pred_region
        %s1541 = ssub.s32 %s32, 2
        // Predicated region
        $region129: #{tpu_custom_call.1} parent=127 // pred_check
          %p1542 = pneg %p474
        $region130: #{tpu_custom_call.1} parent=127 // pred_check_branch
          %1544 = sbr.rel (%p1542) target = $region132
        $region131: #{tpu_custom_call.1} parent=127 // pred_region
          %s1545 = sand.u32 %s459, 1
          %s1546 = scalar_lea.sflag [#allocation8], %s1545
          %s1547 = sand.u32 %s459, 1
          %s1548 = smul.addr %s1547, 8
          %s1549 = scalar_lea.vmem [#allocation15], %s1548
          %1551 = dma.done %s1546, 128
        $region132: #{tpu_custom_call.1} parent=127 // pred_fallthru
          _
      $region128: #{tpu_custom_call.1} parent=5 // pred_fallthru
        _
    $region6: #{tpu_custom_call.1} parent=1 // loop_footer
      %s36 = sadd.s32 1, %s32
    $region7: #{tpu_custom_call.1} parent=1 // loop_footer_branch
      %31 = sbr.rel target = $region3
    $region8: #{tpu_custom_call.1} parent=1 // loop_exit
      _
    %1552 = vsyncpa [#allocation7], 1
    %s1553 = scalar_lea.sflag [#allocation7], 1
    %1554 = vsyncpa %s1553, 1
    %1555 = vsyncpa [#allocation10], 1
    %1556 = vsyncpa [#allocation13], 1
    %1557 = vsyncpa [#allocation8], 1
    %s1558 = scalar_lea.sflag [#allocation8], 1
    %1559 = vsyncpa %s1558, 1

</llo_original>
